<compile_context>
chip_gen: v7x
topology: tpu7x:2x2x1
jax: 0.10.0
libtpu: 0.0.40
codegen_flags: <defaults>
</compile_context>

<pallas_src>
import math
from functools import partial

import jax
import jax.numpy as jnp
from jax.experimental import pallas as pl
from jax.experimental.pallas import tpu as pltpu


# ----------------------------- kernel helpers -----------------------------

def _layer_norm(x, gamma, beta, eps=1e-12):
    # TF-style LayerNorm (epsilon inside the sqrt), matching the torch module.
    u = jnp.mean(x, axis=-1, keepdims=True)
    s = jnp.mean(jnp.square(x - u), axis=-1, keepdims=True)
    return gamma * ((x - u) * jax.lax.rsqrt(s + eps)) + beta


def _gelu(x):
    # Exact erf-based gelu, matching the reference `gelu`.
    return x * 0.5 * (1.0 + jax.lax.erf(x / math.sqrt(2.0)))


# ------------------------------ Pallas kernel ------------------------------

def _encoder_layer_kernel(num_heads, head_dim, tq, approx_recip,
                          x_ref, mask_ref,
                          wq_ref, bq_ref, wkv_ref, bkv_ref,
                          wo_ref, bo_ref, g1_ref, be1_ref,
                          w1_ref, b1_ref, w2_ref, b2_ref, g2_ref, be2_ref,
                          out_ref, kv_ref):
    """One Encoder layer (SelfAttention + Intermediate) for one query tile."""
    NH, D = num_heads, head_dim
    H = NH * D
    cdt = wq_ref.dtype                       # MXU input dtype (f32 or bf16)
    S = x_ref.shape[1]                       # (padded) sequence length

    qidx = pl.program_id(1)

    # --- K/V projection: once per batch row, reused by every query tile. ---
    @pl.when(qidx == 0)
    def _():
        xs = x_ref[0].astype(cdt)                                     # (S, H)
        kv = jnp.dot(xs, wkv_ref[...],
                     preferred_element_type=jnp.float32) + bkv_ref[...]
        # Store head-major so the per-tile attention core needs no K/V relayout.
        k = jnp.transpose(kv[:, :H].reshape(S, NH, D), (1, 0, 2))     # (NH,S,D)
        v = jnp.transpose(kv[:, H:].reshape(S, NH, D), (1, 0, 2))     # (NH,S,D)
        kv_ref[:, :, :D] = k.astype(kv_ref.dtype)
        kv_ref[:, :, D:] = v.astype(kv_ref.dtype)

    # --- Query tile, sliced out of the resident full-sequence block. ---
    q_start = pl.multiple_of(qidx * tq, tq)
    xq = x_ref[0, pl.ds(q_start, tq), :]                              # (TQ,H) f32
    mask = mask_ref[0].astype(jnp.float32)                            # (TQ, S)

    # Hoist small parameters once per grid step.
    bq, bo = bq_ref[...], bo_ref[...]
    g1, be1 = g1_ref[...], be1_ref[...]
    b1, b2 = b1_ref[...], b2_ref[...]
    g2, be2 = g2_ref[...], be2_ref[...]

    # --- SelfAttention ---
    xq_c = xq.astype(cdt)
    q = jnp.dot(xq_c, wq_ref[...], preferred_element_type=jnp.float32) + bq
    qh = jnp.transpose(q.reshape(tq, NH, D), (1, 0, 2)).astype(cdt)   # (NH,TQ,D)
    kh = kv_ref[:, :, :D]                                             # (NH, S, D)
    vh = kv_ref[:, :, D:]                                             # (NH, S, D)

    scale = 1.0 / math.sqrt(D)
    scores = jnp.einsum("hqd,hkd->hqk", qh, kh,
                        preferred_element_type=jnp.float32) * scale   # (NH,TQ,S)
    scores = scores + mask[None, :, :]

    m = jnp.max(scores, axis=-1, keepdims=True)
    e = jnp.exp(scores - m)
    denom = jnp.sum(e, axis=-1, keepdims=True)
    if approx_recip:
        inv = pl.reciprocal(denom, approx=True)
    else:
        inv = 1.0 / denom
    probs = e * inv

    ctx = jnp.einsum("hqk,hkd->hqd", probs.astype(cdt), vh,
                     preferred_element_type=jnp.float32)              # (NH,TQ,D)
    ctx = jnp.transpose(ctx, (1, 0, 2)).reshape(tq, H)                # (TQ, H)

    attn = jnp.dot(ctx.astype(cdt), wo_ref[...],
                   preferred_element_type=jnp.float32) + bo
    h1 = _layer_norm(attn + xq, g1, be1)

    # --- Intermediate (FFN) ---
    inter = _gelu(jnp.dot(h1.astype(cdt), w1_ref[...],
                          preferred_element_type=jnp.float32) + b1)
    ffn = jnp.dot(inter.astype(cdt), w2_ref[...],
                  preferred_element_type=jnp.float32) + b2
    out = _layer_norm(ffn + h1, g2, be2)

    out_ref[0] = out.astype(out_ref.dtype)


# ------------------------------ host wrapper -------------------------------

_BUFFERED_PROBE = None


def _buffered_weights_supported():
    """Feature-detect pl.Buffered(1) single-buffered staging with a tiny probe
    kernel (run once). The real encoder kernel is never wrapped in a broad
    try/except, so its genuine compile errors always surface."""
    global _BUFFERED_PROBE
    if _BUFFERED_PROBE is not None:
        return _BUFFERED_PROBE
    if not hasattr(pl, "Buffered"):
        _BUFFERED_PROBE = False
        return False

    def _copy(i_ref, o_ref):
        o_ref[...] = i_ref[...]

    try:
        y = pl.pallas_call(
            _copy,
            out_shape=jax.ShapeDtypeStruct((8, 128), jnp.float32),
            grid=(1,),
            in_specs=[pl.BlockSpec((8, 128), lambda i: (0, 0),
                                   pipeline_mode=pl.Buffered(1))],
            out_specs=pl.BlockSpec((8, 128), lambda i: (0, 0)),
        )(jnp.zeros((8, 128), jnp.float32))
        jax.block_until_ready(y)
        _BUFFERED_PROBE = True
    except Exception:   # probe only; falls back to default double-buffering.
        _BUFFERED_PROBE = False
    return _BUFFERED_PROBE


def _weight_spec(arr, single_buffer):
    nd = arr.ndim
    idx = lambda b, q, _nd=nd: (0,) * _nd
    if single_buffer:
        # Constant index map across the grid -> nothing to prefetch; a single
        # buffer halves weight VMEM (important on v7x's 64 MiB).
        return pl.BlockSpec(arr.shape, idx, pipeline_mode=pl.Buffered(1))
    return pl.BlockSpec(arr.shape, idx)


def _pick_tiling(S, NH, tq_req):
    """Pick the query-tile size and padded sequence length."""
    if tq_req is None:
        # Bound each live (NH, tq, S) f32 softmax intermediate to ~8 MiB so the
        # working set fits the 64 MiB v7x VMEM alongside bf16 weights.
        budget = 8 << 20
        tq = budget // max(NH * S * 4, 1)
        tq = int(max(8, min(256, tq)))
    else:
        tq = int(tq_req)
    if tq >= S:
        return S, S                       # single full-sequence tile, no pad
    tq = max(8, (tq // 8) * 8)            # sublane-aligned query tile
    s_pad = ((S + tq - 1) // tq) * tq     # pad ragged S instead of tq = S
    return tq, s_pad


def encoder_layer(x, mask, params, *, compute_dtype=jnp.bfloat16, tq=None,
                  mask_dtype=jnp.bfloat16):
    """Run one Encoder layer with a Pallas kernel; grid = (batch, query tiles)."""
    B, S, H = x.shape
    NH = params["num_heads"]
    D = H // NH
    I = params["w1"].shape[1]

    tq_, s_pad = _pick_tiling(S, NH, tq)
    qt = s_pad // tq_

    if s_pad != S:
        pad = s_pad - S
        x_p = jnp.pad(x, ((0, 0), (0, pad), (0, 0)))
        # Padded key columns are fully suppressed; padded query rows are
        # sliced off after the call.
        mask_p = jnp.pad(mask, ((0, 0), (0, pad), (0, pad)),
                         constant_values=-10000.0)
    else:
        x_p, mask_p = x, mask
    # Mask is only 0 / large-negative: bf16 transfer halves the O(S^2) DMA.
    mask_p = mask_p.astype(mask_dtype)

    cdt = jnp.dtype(compute_dtype)
    f32 = jnp.float32

    # Weight packing: fuse K|V, cast matmul weights to the compute dtype,
    # keep biases / LN params in f32.
    wq = params["wq"].astype(cdt)
    bq = params["bq"].astype(f32)
    wkv = jnp.concatenate([params["wk"], params["wv"]], axis=1).astype(cdt)
    bkv = jnp.concatenate([params["bk"], params["bv"]], axis=1).astype(f32)
    wo = params["wo"].astype(cdt)
    bo = params["bo"].astype(f32)
    w1 = params["w1"].astype(cdt)
    b1 = params["b1"].astype(f32)
    w2 = params["w2"].astype(cdt)
    b2 = params["b2"].astype(f32)
    g1, be1 = params["g1"].astype(f32), params["be1"].astype(f32)
    g2, be2 = params["g2"].astype(f32), params["be2"].astype(f32)
    weights = [wq, bq, wkv, bkv, wo, bo, g1, be1, w1, b1, w2, b2, g2, be2]

    approx_recip = cdt == jnp.dtype(jnp.bfloat16)
    single_buffer = _buffered_weights_supported()

    # --- cost estimate (K/V projection is no longer multiplied by QT). ---
    flops = int(2 * B * s_pad * H * (2 * H)     # fused K|V projection (per row)
                + 2 * B * s_pad * H * H         # Q projection
                + 4 * B * s_pad * s_pad * H     # scores + context
                + 2 * B * s_pad * H * H         # output projection
                + 4 * B * s_pad * H * I)        # FFN
    transcend = int(B * NH * s_pad * s_pad + B * s_pad * I)
    bytes_acc = int(B * s_pad * H * 4
                    + B * s_pad * s_pad * mask_p.dtype.itemsize
                    + B * s_pad * H * 4
                    + sum(int(w.size) * w.dtype.itemsize for w in weights))
    ce = pl.CostEstimate(flops=flops, transcendentals=transcend,
                         bytes_accessed=bytes_acc)

    # --- explicit VMEM budget from the actual footprint (+headroom). ---
    lane = lambda n: -(-n // 128) * 128
    sub = lambda n: -(-n // 8) * 8
    c_sz = cdt.itemsize
    m_sz = jnp.dtype(mask_dtype).itemsize
    w_bytes = sum(int(w.size) * w.dtype.itemsize for w in weights)
    w_bytes *= 1 if single_buffer else 2
    act_bytes = (2 * sub(s_pad) * lane(H) * 4          # x block (double-buffered)
                 + 2 * sub(tq_) * lane(s_pad) * m_sz   # mask block
                 + 2 * sub(tq_) * lane(H) * 4          # out block
                 + NH * sub(s_pad) * lane(2 * D) * c_sz  # K/V scratch
                 + 3 * NH * sub(tq_) * lane(s_pad) * 4   # scores / exp / probs
                 + 6 * sub(tq_) * lane(max(H, I)) * 4)   # misc activations
    vmem_limit = min(int(1.5 * (w_bytes + act_bytes)) + (16 << 20), 100 << 20)

    in_specs = ([pl.BlockSpec((1, s_pad, H), lambda b, q: (b, 0, 0)),   # x (full seq)
                 pl.BlockSpec((1, tq_, s_pad), lambda b, q: (b, q, 0))]  # mask rows
                + [_weight_spec(w, single_buffer) for w in weights])

    out = pl.pallas_call(
        partial(_encoder_layer_kernel, NH, D, tq_, approx_recip),
        out_shape=jax.ShapeDtypeStruct((B, s_pad, H), x.dtype),
        grid=(B, qt),
        in_specs=in_specs,
        out_specs=pl.BlockSpec((1, tq_, H), lambda b, q: (b, q, 0)),
        scratch_shapes=[pltpu.VMEM((NH, s_pad, 2 * D), cdt)],   # head-major K|V
        compiler_params=pltpu.CompilerParams(
            dimension_semantics=("parallel", "arbitrary"),
            vmem_limit_bytes=vmem_limit),
        cost_estimate=ce,
    )(x_p, mask_p, *weights)

    if s_pad != S:
        out = out[:, :S, :]
    return out


def encoder_forward(hidden_states, attention_mask, layer_params,
                    output_all_encoded_layers=True, **kwargs):
    all_encoder_layers = []
    h = hidden_states
    for p in layer_params:
        h = encoder_layer(h, attention_mask, p, **kwargs)
        if output_all_encoded_layers:
            all_encoder_layers.append(h)
    if not output_all_encoded_layers:
        all_encoder_layers.append(h)
    return all_encoder_layers


# --------------------------- pure-JAX reference ----------------------------

def _ref_layer(x, mask, p):
    NH = p["num_heads"]
    B, S, H = x.shape
    D = H // NH
    q = x @ p["wq"] + p["bq"]
    k = x @ p["wk"] + p["bk"]
    v = x @ p["wv"] + p["bv"]

    def split(t):  # (B,S,H) -> (B,NH,S,D)
        return t.reshape(B, S, NH, D).transpose(0, 2, 1, 3)

    qh, kh, vh = split(q), split(k), split(v)
    scores = jnp.einsum("bhqd,bhkd->bhqk", qh, kh) / math.sqrt(D)
    scores = scores + mask[:, None, :, :]
    probs = jax.nn.softmax(scores, axis=-1)
    ctx = jnp.einsum("bhqk,bhkd->bhqd", probs, vh)
    ctx = ctx.transpose(0, 2, 1, 3).reshape(B, S, H)
    attn_out = ctx @ p["wo"] + p["bo"]
    h1 = _layer_norm(attn_out + x, p["g1"], p["be1"])
    inter = _gelu(h1 @ p["w1"] + p["b1"])
    ffn = inter @ p["w2"] + p["b2"]
    return _layer_norm(ffn + h1, p["g2"], p["be2"])


def _causal_mask(B, S):
    tril = jnp.tril(jnp.ones((S, S), jnp.float32))
    return jnp.broadcast_to((1.0 - tril) * -10000.0, (B, S, S))


# ---------------------------------- main -----------------------------------

if __name__ == "__main__":
    key = jax.random.PRNGKey(0)

    def make_params(k, H, NH, I):
        ks = jax.random.split(k, 12)
        lin = lambda kk, fi, fo: jax.random.normal(kk, (fi, fo), jnp.float32) * 0.02
        bias = lambda kk, fo: jax.random.normal(kk, (1, fo), jnp.float32) * 0.02
        return dict(
            num_heads=NH,
            wq=lin(ks[0], H, H), bq=bias(ks[1], H),
            wk=lin(ks[2], H, H), bk=bias(ks[3], H),
            wv=lin(ks[4], H, H), bv=bias(ks[5], H),
            wo=lin(ks[6], H, H), bo=bias(ks[7], H),
            g1=jnp.ones((1, H), jnp.float32), be1=jnp.zeros((1, H), jnp.float32),
            w1=lin(ks[8], H, I), b1=bias(ks[9], I),
            w2=lin(ks[10], I, H), b2=bias(ks[11], H),
            g2=jnp.ones((1, H), jnp.float32), be2=jnp.zeros((1, H), jnp.float32),
        )

    # --- Test 1: multi-layer Encoder (B=2, S=8, H=32, 2 heads, 2 layers) ---
    B, S, H, NH, L = 2, 8, 32, 2, 2
    I = 4 * H
    kp, kx = jax.random.split(key)
    layer_p = make_params(kp, H, NH, I)
    layer_params = [layer_p for _ in range(L)]      # mirrors copy.deepcopy init

    x = jax.random.normal(kx, (B, S, H), jnp.float32)
    mask = _causal_mask(B, S)

    outs = encoder_forward(x, mask, layer_params, True,
                           compute_dtype=jnp.float32)
    outs = [jax.block_until_ready(o) for o in outs]
    h_ref = x
    for li, p in enumerate(layer_params):
        h_ref = _ref_layer(h_ref, mask, p)
        assert jnp.allclose(outs[li], h_ref, atol=1e-4, rtol=1e-4), \
            f"f32 mismatch at layer {li}"

    outs_bf16 = encoder_forward(x, mask, layer_params, False,
                                compute_dtype=jnp.bfloat16)
    out_bf16 = jax.block_until_ready(outs_bf16[-1])
    assert jnp.allclose(out_bf16, h_ref, atol=1e-1, rtol=1e-1), "bf16 mismatch"

    # --- Test 2: multiple query tiles per row (S=16, tq=8): K/V scratch reuse ---
    S2 = 16
    x2 = jax.random.normal(jax.random.PRNGKey(1), (B, S2, H), jnp.float32)
    mask2 = _causal_mask(B, S2)
    out2 = jax.block_until_ready(
        encoder_layer(x2, mask2, layer_p, compute_dtype=jnp.float32, tq=8))
    ref2 = _ref_layer(x2, mask2, layer_p)
    assert jnp.allclose(out2, ref2, atol=1e-4, rtol=1e-4), "tiled-q mismatch"

    # --- Test 3: ragged S (S=12, tq=8): padded-sequence path ---
    S3 = 12
    x3 = jax.random.normal(jax.random.PRNGKey(2), (B, S3, H), jnp.float32)
    mask3 = _causal_mask(B, S3)
    out3 = jax.block_until_ready(
        encoder_layer(x3, mask3, layer_p, compute_dtype=jnp.float32, tq=8))
    ref3 = _ref_layer(x3, mask3, layer_p)
    assert jnp.allclose(out3, ref3, atol=1e-4, rtol=1e-4), "padded-S mismatch"

    print("KERNEL_OK")
</pallas_src>

<mosaic_0001>
module attributes {stable_mosaic.version = 11 : i64} {
  func.func @_copy(%arg0: i32, %arg1: memref<8x128xf32, #tpu.memory_space<vmem>>, %arg2: memref<8x128xf32, #tpu.memory_space<vmem>>) attributes {dimension_semantics = [#tpu.dimension_semantics<arbitrary>], iteration_bounds = array<i64: 1>, scalar_prefetch = 0 : i64, scratch_operands = 0 : i64, tpu.core_type = #tpu.core_type<tc>, window_params = [{pipeline_mode = #tpu.pipeline_mode<synchronous>, transform_indices = @transform_0, window_bounds = array<i64: 8, 128>}, {pipeline_mode = #tpu.pipeline_mode<synchronous>, transform_indices = @transform_1, window_bounds = array<i64: 8, 128>}]} {
    %c0 = arith.constant 0 : index
    %c0_0 = arith.constant 0 : index
    %0 = vector.load %arg1[%c0, %c0_0] : memref<8x128xf32, #tpu.memory_space<vmem>>, vector<8x128xf32>
    %c0_1 = arith.constant 0 : index
    %c0_2 = arith.constant 0 : index
    %1 = vector.load %arg2[%c0_1, %c0_2] : memref<8x128xf32, #tpu.memory_space<vmem>>, vector<8x128xf32>
    tpu.vector_store %arg2[%c0_1, %c0_2], %0 {strides = array<i32>} : memref<8x128xf32, #tpu.memory_space<vmem>>, vector<8x128xf32>,
    return
  }
  func.func @transform_0(%arg0: i32) -> (i32, i32) {
    %c0_i32 = arith.constant 0 : i32
    %c0_i32_0 = arith.constant 0 : i32
    %c0_i32_1 = arith.constant 0 : i32
    return %c0_i32, %c0_i32_0 : i32, i32
  }
  func.func @transform_1(%arg0: i32) -> (i32, i32) {
    %c0_i32 = arith.constant 0 : i32
    %c0_i32_0 = arith.constant 0 : i32
    %c0_i32_1 = arith.constant 0 : i32
    return %c0_i32, %c0_i32_0 : i32, i32
  }
}

module attributes {stable_mosaic.version = 11 : i64} {
  func.func @_encoder_layer_kernel(%arg0: i32, %arg1: i32, %arg2: memref<1x8x32xf32, #tpu.memory_space<vmem>>, %arg3: memref<1x8x8xbf16, #tpu.memory_space<vmem>>, %arg4: memref<32x32xf32, #tpu.memory_space<vmem>>, %arg5: memref<1x32xf32, #tpu.memory_space<vmem>>, %arg6: memref<32x64xf32, #tpu.memory_space<vmem>>, %arg7: memref<1x64xf32, #tpu.memory_space<vmem>>, %arg8: memref<32x32xf32, #tpu.memory_space<vmem>>, %arg9: memref<1x32xf32, #tpu.memory_space<vmem>>, %arg10: memref<1x32xf32, #tpu.memory_space<vmem>>, %arg11: memref<1x32xf32, #tpu.memory_space<vmem>>, %arg12: memref<32x128xf32, #tpu.memory_space<vmem>>, %arg13: memref<1x128xf32, #tpu.memory_space<vmem>>, %arg14: memref<128x32xf32, #tpu.memory_space<vmem>>, %arg15: memref<1x32xf32, #tpu.memory_space<vmem>>, %arg16: memref<1x32xf32, #tpu.memory_space<vmem>>, %arg17: memref<1x32xf32, #tpu.memory_space<vmem>>, %arg18: memref<1x8x32xf32, #tpu.memory_space<vmem>>, %arg19: memref<2x8x32xf32, #tpu.memory_space<vmem>>) attributes {dimension_semantics = [#tpu.dimension_semantics<parallel>, #tpu.dimension_semantics<arbitrary>], iteration_bounds = array<i64: 2, 1>, scalar_prefetch = 0 : i64, scratch_operands = 1 : i64, tpu.core_type = #tpu.core_type<tc>, window_params = [{transform_indices = @transform_0, window_bounds = array<i64: 1, 8, 32>}, {transform_indices = @transform_1, window_bounds = array<i64: 1, 8, 8>}, {pipeline_mode = #tpu.pipeline_mode<synchronous>, transform_indices = @transform_2, window_bounds = array<i64: 32, 32>}, {pipeline_mode = #tpu.pipeline_mode<synchronous>, transform_indices = @transform_3, window_bounds = array<i64: 1, 32>}, {pipeline_mode = #tpu.pipeline_mode<synchronous>, transform_indices = @transform_4, window_bounds = array<i64: 32, 64>}, {pipeline_mode = #tpu.pipeline_mode<synchronous>, transform_indices = @transform_5, window_bounds = array<i64: 1, 64>}, {pipeline_mode = #tpu.pipeline_mode<synchronous>, transform_indices = @transform_6, window_bounds = array<i64: 32, 32>}, {pipeline_mode = #tpu.pipeline_mode<synchronous>, transform_indices = @transform_7, window_bounds = array<i64: 1, 32>}, {pipeline_mode = #tpu.pipeline_mode<synchronous>, transform_indices = @transform_8, window_bounds = array<i64: 1, 32>}, {pipeline_mode = #tpu.pipeline_mode<synchronous>, transform_indices = @transform_9, window_bounds = array<i64: 1, 32>}, {pipeline_mode = #tpu.pipeline_mode<synchronous>, transform_indices = @transform_10, window_bounds = array<i64: 32, 128>}, {pipeline_mode = #tpu.pipeline_mode<synchronous>, transform_indices = @transform_11, window_bounds = array<i64: 1, 128>}, {pipeline_mode = #tpu.pipeline_mode<synchronous>, transform_indices = @transform_12, window_bounds = array<i64: 128, 32>}, {pipeline_mode = #tpu.pipeline_mode<synchronous>, transform_indices = @transform_13, window_bounds = array<i64: 1, 32>}, {pipeline_mode = #tpu.pipeline_mode<synchronous>, transform_indices = @transform_14, window_bounds = array<i64: 1, 32>}, {pipeline_mode = #tpu.pipeline_mode<synchronous>, transform_indices = @transform_15, window_bounds = array<i64: 1, 32>}, {transform_indices = @transform_16, window_bounds = array<i64: 1, 8, 32>}]} {
    %c0_i32 = arith.constant 0 : i32
    %0 = arith.cmpi eq, %arg1, %c0_i32 : i32
    %1 = arith.extui %0 : i1 to i32
    %c0_i32_0 = arith.constant 0 : i32
    %2 = arith.cmpi ne, %1, %c0_i32_0 : i32
    scf.if %2 {
      %c0_59 = arith.constant 0 : index
      %c0_60 = arith.constant 0 : index
      %c0_61 = arith.constant 0 : index
      %116 = vector.load %arg2[%c0_59, %c0_60, %c0_61] : memref<1x8x32xf32, #tpu.memory_space<vmem>>, vector<1x8x32xf32>
      %117 = vector.shape_cast %116 : vector<1x8x32xf32> to vector<8x32xf32>
      %c0_62 = arith.constant 0 : index
      %c0_63 = arith.constant 0 : index
      %118 = vector.load %arg6[%c0_62, %c0_63] : memref<32x64xf32, #tpu.memory_space<vmem>>, vector<32x64xf32>
      %cst_64 = arith.constant dense<0.000000e+00> : vector<8x64xf32>
      %119 = tpu.matmul %117, %118, %cst_64 {dimension_numbers = #tpu.dot_dimension_numbers<[1], [0], [0], [1], [0, 0, 1, 1], [], []>} : vector<8x32xf32>, vector<32x64xf32>, vector<8x64xf32> -> vector<8x64xf32>
      %c0_65 = arith.constant 0 : index
      %c0_66 = arith.constant 0 : index
      %120 = vector.load %arg7[%c0_65, %c0_66] : memref<1x64xf32, #tpu.memory_space<vmem>>, vector<1x64xf32>
      %121 = vector.broadcast %120 : vector<1x64xf32> to vector<8x64xf32>
      %122 = arith.addf %119, %121 : vector<8x64xf32>
      %123 = vector.extract_strided_slice %122 {offsets = [0, 0], sizes = [8, 32], strides = [1, 1]} : vector<8x64xf32> to vector<8x32xf32>
      %124 = vector.shape_cast %123 : vector<8x32xf32> to vector<8x2x16xf32>
      %125 = tpu.transpose %124, [1, 0, 2] : vector<8x2x16xf32> -> vector<2x8x16xf32>
      %126 = vector.extract_strided_slice %122 {offsets = [0, 32], sizes = [8, 32], strides = [1, 1]} : vector<8x64xf32> to vector<8x32xf32>
      %127 = vector.shape_cast %126 : vector<8x32xf32> to vector<8x2x16xf32>
      %128 = tpu.transpose %127, [1, 0, 2] : vector<8x2x16xf32> -> vector<2x8x16xf32>
      %c0_67 = arith.constant 0 : index
      %c0_68 = arith.constant 0 : index
      %c0_69 = arith.constant 0 : index
      %129 = vector.load %arg19[%c0_67, %c0_68, %c0_69] : memref<2x8x32xf32, #tpu.memory_space<vmem>>, vector<2x8x16xf32>
      tpu.vector_store %arg19[%c0_67, %c0_68, %c0_69], %125 {strides = array<i32>} : memref<2x8x32xf32, #tpu.memory_space<vmem>>, vector<2x8x16xf32>,
      %c0_70 = arith.constant 0 : index
      %c0_71 = arith.constant 0 : index
      %c16_72 = arith.constant 16 : index
      %130 = vector.load %arg19[%c0_70, %c0_71, %c16_72] : memref<2x8x32xf32, #tpu.memory_space<vmem>>, vector<2x8x16xf32>
      tpu.vector_store %arg19[%c0_70, %c0_71, %c16_72], %128 {strides = array<i32>} : memref<2x8x32xf32, #tpu.memory_space<vmem>>, vector<2x8x16xf32>,
    } else {
    }
    %c8_i32 = arith.constant 8 : i32
    %3 = arith.muli %arg1, %c8_i32 : i32
    %4 = tpu.assume_multiple %3, 8 : i32
    %c0 = arith.constant 0 : index
    %5 = arith.index_cast %4 : i32 to index
    %c0_1 = arith.constant 0 : index
    %6 = vector.load %arg2[%c0, %5, %c0_1] : memref<1x8x32xf32, #tpu.memory_space<vmem>>, vector<1x8x32xf32>
    %7 = vector.shape_cast %6 : vector<1x8x32xf32> to vector<8x32xf32>
    %c0_2 = arith.constant 0 : index
    %c0_3 = arith.constant 0 : index
    %c0_4 = arith.constant 0 : index
    %8 = vector.load %arg3[%c0_2, %c0_3, %c0_4] : memref<1x8x8xbf16, #tpu.memory_space<vmem>>, vector<1x8x8xbf16>
    %9 = vector.shape_cast %8 : vector<1x8x8xbf16> to vector<8x8xbf16>
    %10 = arith.extf %9 : vector<8x8xbf16> to vector<8x8xf32>
    %c0_5 = arith.constant 0 : index
    %c0_6 = arith.constant 0 : index
    %11 = vector.load %arg5[%c0_5, %c0_6] : memref<1x32xf32, #tpu.memory_space<vmem>>, vector<1x32xf32>
    %c0_7 = arith.constant 0 : index
    %c0_8 = arith.constant 0 : index
    %12 = vector.load %arg9[%c0_7, %c0_8] : memref<1x32xf32, #tpu.memory_space<vmem>>, vector<1x32xf32>
    %c0_9 = arith.constant 0 : index
    %c0_10 = arith.constant 0 : index
    %13 = vector.load %arg10[%c0_9, %c0_10] : memref<1x32xf32, #tpu.memory_space<vmem>>, vector<1x32xf32>
    %c0_11 = arith.constant 0 : index
    %c0_12 = arith.constant 0 : index
    %14 = vector.load %arg11[%c0_11, %c0_12] : memref<1x32xf32, #tpu.memory_space<vmem>>, vector<1x32xf32>
    %c0_13 = arith.constant 0 : index
    %c0_14 = arith.constant 0 : index
    %15 = vector.load %arg13[%c0_13, %c0_14] : memref<1x128xf32, #tpu.memory_space<vmem>>, vector<1x128xf32>
    %c0_15 = arith.constant 0 : index
    %c0_16 = arith.constant 0 : index
    %16 = vector.load %arg15[%c0_15, %c0_16] : memref<1x32xf32, #tpu.memory_space<vmem>>, vector<1x32xf32>
    %c0_17 = arith.constant 0 : index
    %c0_18 = arith.constant 0 : index
    %17 = vector.load %arg16[%c0_17, %c0_18] : memref<1x32xf32, #tpu.memory_space<vmem>>, vector<1x32xf32>
    %c0_19 = arith.constant 0 : index
    %c0_20 = arith.constant 0 : index
    %18 = vector.load %arg17[%c0_19, %c0_20] : memref<1x32xf32, #tpu.memory_space<vmem>>, vector<1x32xf32>
    %c0_21 = arith.constant 0 : index
    %c0_22 = arith.constant 0 : index
    %19 = vector.load %arg4[%c0_21, %c0_22] : memref<32x32xf32, #tpu.memory_space<vmem>>, vector<32x32xf32>
    %cst = arith.constant dense<0.000000e+00> : vector<8x32xf32>
    %20 = tpu.matmul %7, %19, %cst {dimension_numbers = #tpu.dot_dimension_numbers<[1], [0], [0], [1], [0, 0, 1, 1], [], []>} : vector<8x32xf32>, vector<32x32xf32>, vector<8x32xf32> -> vector<8x32xf32>
    %21 = vector.broadcast %11 : vector<1x32xf32> to vector<8x32xf32>
    %22 = arith.addf %20, %21 : vector<8x32xf32>
    %23 = vector.shape_cast %22 : vector<8x32xf32> to vector<8x2x16xf32>
    %24 = tpu.transpose %23, [1, 0, 2] : vector<8x2x16xf32> -> vector<2x8x16xf32>
    %c0_23 = arith.constant 0 : index
    %c0_24 = arith.constant 0 : index
    %c0_25 = arith.constant 0 : index
    %25 = vector.load %arg19[%c0_23, %c0_24, %c0_25] : memref<2x8x32xf32, #tpu.memory_space<vmem>>, vector<2x8x16xf32>
    %c0_26 = arith.constant 0 : index
    %c0_27 = arith.constant 0 : index
    %c16 = arith.constant 16 : index
    %26 = vector.load %arg19[%c0_26, %c0_27, %c16] : memref<2x8x32xf32, #tpu.memory_space<vmem>>, vector<2x8x16xf32>
    "tpu.trace_start"() <{level = 10 : i32, message = "hqd,hkd->hqk"}> : () -> ()
    %cst_28 = arith.constant dense<0.000000e+00> : vector<2x8x8xf32>
    %27 = tpu.matmul %24, %25, %cst_28 {dimension_numbers = #tpu.dot_dimension_numbers<[2], [2], [1], [1], [0, 0, 0, 1, 1, 1], [0], [0]>} : vector<2x8x16xf32>, vector<2x8x16xf32>, vector<2x8x8xf32> -> vector<2x8x8xf32>
    "tpu.trace_stop"() : () -> ()
    %cst_29 = arith.constant 2.500000e-01 : f32
    %28 = vector.broadcast %cst_29 : f32 to vector<2x8x8xf32>
    %29 = arith.mulf %27, %28 : vector<2x8x8xf32>
    %30 = vector.shape_cast %10 : vector<8x8xf32> to vector<1x8x8xf32>
    %31 = vector.broadcast %30 : vector<1x8x8xf32> to vector<2x8x8xf32>
    %32 = arith.addf %29, %31 : vector<2x8x8xf32>
    %cst_30 = arith.constant dense<0xFF800000> : vector<2x8xf32>
    %33 = vector.multi_reduction <maximumf>, %32, %cst_30 [2] : vector<2x8x8xf32> to vector<2x8xf32>
    %34 = vector.shape_cast %33 : vector<2x8xf32> to vector<2x8x1xf32>
    %35 = vector.broadcast %34 : vector<2x8x1xf32> to vector<2x8x8xf32>
    %36 = arith.subf %32, %35 : vector<2x8x8xf32>
    %37 = math.exp %36 : vector<2x8x8xf32>
    %cst_31 = arith.constant dense<0.000000e+00> : vector<2x8xf32>
    %38 = vector.multi_reduction <add>, %37, %cst_31 [2] : vector<2x8x8xf32> to vector<2x8xf32>
    %39 = vector.shape_cast %38 : vector<2x8xf32> to vector<2x8x1xf32>
    %cst_32 = arith.constant 1.000000e+00 : f32
    %40 = vector.broadcast %cst_32 : f32 to vector<2x8x1xf32>
    %41 = arith.divf %40, %39 : vector<2x8x1xf32>
    %42 = vector.broadcast %41 : vector<2x8x1xf32> to vector<2x8x8xf32>
    %43 = arith.mulf %37, %42 : vector<2x8x8xf32>
    "tpu.trace_start"() <{level = 10 : i32, message = "hqk,hkd->hqd"}> : () -> ()
    %cst_33 = arith.constant dense<0.000000e+00> : vector<2x8x16xf32>
    %44 = tpu.matmul %43, %26, %cst_33 {dimension_numbers = #tpu.dot_dimension_numbers<[2], [1], [1], [2], [0, 0, 0, 1, 1, 2], [0], [0]>} : vector<2x8x8xf32>, vector<2x8x16xf32>, vector<2x8x16xf32> -> vector<2x8x16xf32>
    "tpu.trace_stop"() : () -> ()
    %45 = tpu.transpose %44, [1, 0, 2] : vector<2x8x16xf32> -> vector<8x2x16xf32>
    %46 = vector.shape_cast %45 : vector<8x2x16xf32> to vector<8x32xf32>
    %c0_34 = arith.constant 0 : index
    %c0_35 = arith.constant 0 : index
    %47 = vector.load %arg8[%c0_34, %c0_35] : memref<32x32xf32, #tpu.memory_space<vmem>>, vector<32x32xf32>
    %cst_36 = arith.constant dense<0.000000e+00> : vector<8x32xf32>
    %48 = tpu.matmul %46, %47, %cst_36 {dimension_numbers = #tpu.dot_dimension_numbers<[1], [0], [0], [1], [0, 0, 1, 1], [], []>} : vector<8x32xf32>, vector<32x32xf32>, vector<8x32xf32> -> vector<8x32xf32>
    %49 = vector.broadcast %12 : vector<1x32xf32> to vector<8x32xf32>
    %50 = arith.addf %48, %49 : vector<8x32xf32>
    %51 = arith.addf %50, %7 : vector<8x32xf32>
    %cst_37 = arith.constant dense<0.000000e+00> : vector<8xf32>
    %52 = vector.multi_reduction <add>, %51, %cst_37 [1] : vector<8x32xf32> to vector<8xf32>
    %53 = vector.shape_cast %52 : vector<8xf32> to vector<8x1xf32>
    %cst_38 = arith.constant 3.200000e+01 : f32
    %54 = vector.broadcast %cst_38 : f32 to vector<8x1xf32>
    %55 = arith.divf %53, %54 : vector<8x1xf32>
    %56 = vector.broadcast %55 : vector<8x1xf32> to vector<8x32xf32>
    %57 = arith.subf %51, %56 : vector<8x32xf32>
    %58 = arith.mulf %57, %57 : vector<8x32xf32>
    %cst_39 = arith.constant dense<0.000000e+00> : vector<8xf32>
    %59 = vector.multi_reduction <add>, %58, %cst_39 [1] : vector<8x32xf32> to vector<8xf32>
    %60 = vector.shape_cast %59 : vector<8xf32> to vector<8x1xf32>
    %cst_40 = arith.constant 3.200000e+01 : f32
    %61 = vector.broadcast %cst_40 : f32 to vector<8x1xf32>
    %62 = arith.divf %60, %61 : vector<8x1xf32>
    %63 = vector.broadcast %55 : vector<8x1xf32> to vector<8x32xf32>
    %64 = arith.subf %51, %63 : vector<8x32xf32>
    %cst_41 = arith.constant 9.99999996E-13 : f32
    %65 = vector.broadcast %cst_41 : f32 to vector<8x1xf32>
    %66 = arith.addf %62, %65 : vector<8x1xf32>
    %67 = math.rsqrt %66 : vector<8x1xf32>
    %68 = vector.broadcast %67 : vector<8x1xf32> to vector<8x32xf32>
    %69 = arith.mulf %64, %68 : vector<8x32xf32>
    %70 = vector.broadcast %13 : vector<1x32xf32> to vector<8x32xf32>
    %71 = arith.mulf %70, %69 : vector<8x32xf32>
    %72 = vector.broadcast %14 : vector<1x32xf32> to vector<8x32xf32>
    %73 = arith.addf %71, %72 : vector<8x32xf32>
    %c0_42 = arith.constant 0 : index
    %c0_43 = arith.constant 0 : index
    %74 = vector.load %arg12[%c0_42, %c0_43] : memref<32x128xf32, #tpu.memory_space<vmem>>, vector<32x128xf32>
    %cst_44 = arith.constant dense<0.000000e+00> : vector<8x128xf32>
    %75 = tpu.matmul %73, %74, %cst_44 {dimension_numbers = #tpu.dot_dimension_numbers<[1], [0], [0], [1], [0, 0, 1, 1], [], []>} : vector<8x32xf32>, vector<32x128xf32>, vector<8x128xf32> -> vector<8x128xf32>
    %76 = vector.broadcast %15 : vector<1x128xf32> to vector<8x128xf32>
    %77 = arith.addf %75, %76 : vector<8x128xf32>
    %cst_45 = arith.constant 5.000000e-01 : f32
    %78 = vector.broadcast %cst_45 : f32 to vector<8x128xf32>
    %79 = arith.mulf %77, %78 : vector<8x128xf32>
    %cst_46 = arith.constant 1.41421354 : f32
    %80 = vector.broadcast %cst_46 : f32 to vector<8x128xf32>
    %81 = arith.divf %77, %80 : vector<8x128xf32>
    %82 = math.erf %81 : vector<8x128xf32>
    %cst_47 = arith.constant 1.000000e+00 : f32
    %83 = vector.broadcast %cst_47 : f32 to vector<8x128xf32>
    %84 = arith.addf %83, %82 : vector<8x128xf32>
    %85 = arith.mulf %79, %84 : vector<8x128xf32>
    %c0_48 = arith.constant 0 : index
    %c0_49 = arith.constant 0 : index
    %86 = vector.load %arg14[%c0_48, %c0_49] : memref<128x32xf32, #tpu.memory_space<vmem>>, vector<128x32xf32>
    %cst_50 = arith.constant dense<0.000000e+00> : vector<8x32xf32>
    %87 = tpu.matmul %85, %86, %cst_50 {dimension_numbers = #tpu.dot_dimension_numbers<[1], [0], [0], [1], [0, 0, 1, 1], [], []>} : vector<8x128xf32>, vector<128x32xf32>, vector<8x32xf32> -> vector<8x32xf32>
    %88 = vector.broadcast %16 : vector<1x32xf32> to vector<8x32xf32>
    %89 = arith.addf %87, %88 : vector<8x32xf32>
    %90 = arith.addf %89, %73 : vector<8x32xf32>
    %cst_51 = arith.constant dense<0.000000e+00> : vector<8xf32>
    %91 = vector.multi_reduction <add>, %90, %cst_51 [1] : vector<8x32xf32> to vector<8xf32>
    %92 = vector.shape_cast %91 : vector<8xf32> to vector<8x1xf32>
    %cst_52 = arith.constant 3.200000e+01 : f32
    %93 = vector.broadcast %cst_52 : f32 to vector<8x1xf32>
    %94 = arith.divf %92, %93 : vector<8x1xf32>
    %95 = vector.broadcast %94 : vector<8x1xf32> to vector<8x32xf32>
    %96 = arith.subf %90, %95 : vector<8x32xf32>
    %97 = arith.mulf %96, %96 : vector<8x32xf32>
    %cst_53 = arith.constant dense<0.000000e+00> : vector<8xf32>
    %98 = vector.multi_reduction <add>, %97, %cst_53 [1] : vector<8x32xf32> to vector<8xf32>
    %99 = vector.shape_cast %98 : vector<8xf32> to vector<8x1xf32>
    %cst_54 = arith.constant 3.200000e+01 : f32
    %100 = vector.broadcast %cst_54 : f32 to vector<8x1xf32>
    %101 = arith.divf %99, %100 : vector<8x1xf32>
    %102 = vector.broadcast %94 : vector<8x1xf32> to vector<8x32xf32>
    %103 = arith.subf %90, %102 : vector<8x32xf32>
    %cst_55 = arith.constant 9.99999996E-13 : f32
    %104 = vector.broadcast %cst_55 : f32 to vector<8x1xf32>
    %105 = arith.addf %101, %104 : vector<8x1xf32>
    %106 = math.rsqrt %105 : vector<8x1xf32>
    %107 = vector.broadcast %106 : vector<8x1xf32> to vector<8x32xf32>
    %108 = arith.mulf %103, %107 : vector<8x32xf32>
    %109 = vector.broadcast %17 : vector<1x32xf32> to vector<8x32xf32>
    %110 = arith.mulf %109, %108 : vector<8x32xf32>
    %111 = vector.broadcast %18 : vector<1x32xf32> to vector<8x32xf32>
    %112 = arith.addf %110, %111 : vector<8x32xf32>
    %c0_56 = arith.constant 0 : index
    %c0_57 = arith.constant 0 : index
    %c0_58 = arith.constant 0 : index
    %113 = vector.load %arg18[%c0_56, %c0_57, %c0_58] : memref<1x8x32xf32, #tpu.memory_space<vmem>>, vector<1x8x32xf32>
    %114 = vector.shape_cast %113 : vector<1x8x32xf32> to vector<8x32xf32>
    %115 = vector.shape_cast %112 : vector<8x32xf32> to vector<1x8x32xf32>
    tpu.vector_store %arg18[%c0_56, %c0_57, %c0_58], %115 {strides = array<i32>} : memref<1x8x32xf32, #tpu.memory_space<vmem>>, vector<1x8x32xf32>,
    return
  }
  func.func @transform_0(%arg0: i32, %arg1: i32) -> (i32, i32, i32) {
    %c0_i32 = arith.constant 0 : i32
    %c0_i32_0 = arith.constant 0 : i32
    %c0_i32_1 = arith.constant 0 : i32
    return %arg0, %c0_i32, %c0_i32_0 : i32, i32, i32
  }
  func.func @transform_1(%arg0: i32, %arg1: i32) -> (i32, i32, i32) {
    %c0_i32 = arith.constant 0 : i32
    %c0_i32_0 = arith.constant 0 : i32
    return %arg0, %arg1, %c0_i32 : i32, i32, i32
  }
  func.func @transform_2(%arg0: i32, %arg1: i32) -> (i32, i32) {
    %c0_i32 = arith.constant 0 : i32
    %c0_i32_0 = arith.constant 0 : i32
    %c0_i32_1 = arith.constant 0 : i32
    return %c0_i32, %c0_i32_0 : i32, i32
  }
  func.func @transform_3(%arg0: i32, %arg1: i32) -> (i32, i32) {
    %c0_i32 = arith.constant 0 : i32
    %c0_i32_0 = arith.constant 0 : i32
    %c0_i32_1 = arith.constant 0 : i32
    return %c0_i32, %c0_i32_0 : i32, i32
  }
  func.func @transform_4(%arg0: i32, %arg1: i32) -> (i32, i32) {
    %c0_i32 = arith.constant 0 : i32
    %c0_i32_0 = arith.constant 0 : i32
    %c0_i32_1 = arith.constant 0 : i32
    return %c0_i32, %c0_i32_0 : i32, i32
  }
  func.func @transform_5(%arg0: i32, %arg1: i32) -> (i32, i32) {
    %c0_i32 = arith.constant 0 : i32
    %c0_i32_0 = arith.constant 0 : i32
    %c0_i32_1 = arith.constant 0 : i32
    return %c0_i32, %c0_i32_0 : i32, i32
  }
  func.func @transform_6(%arg0: i32, %arg1: i32) -> (i32, i32) {
    %c0_i32 = arith.constant 0 : i32
    %c0_i32_0 = arith.constant 0 : i32
    %c0_i32_1 = arith.constant 0 : i32
    return %c0_i32, %c0_i32_0 : i32, i32
  }
  func.func @transform_7(%arg0: i32, %arg1: i32) -> (i32, i32) {
    %c0_i32 = arith.constant 0 : i32
    %c0_i32_0 = arith.constant 0 : i32
    %c0_i32_1 = arith.constant 0 : i32
    return %c0_i32, %c0_i32_0 : i32, i32
  }
  func.func @transform_8(%arg0: i32, %arg1: i32) -> (i32, i32) {
    %c0_i32 = arith.constant 0 : i32
    %c0_i32_0 = arith.constant 0 : i32
    %c0_i32_1 = arith.constant 0 : i32
    return %c0_i32, %c0_i32_0 : i32, i32
  }
  func.func @transform_9(%arg0: i32, %arg1: i32) -> (i32, i32) {
    %c0_i32 = arith.constant 0 : i32
    %c0_i32_0 = arith.constant 0 : i32
    %c0_i32_1 = arith.constant 0 : i32
    return %c0_i32, %c0_i32_0 : i32, i32
  }
  func.func @transform_10(%arg0: i32, %arg1: i32) -> (i32, i32) {
    %c0_i32 = arith.constant 0 : i32
    %c0_i32_0 = arith.constant 0 : i32
    %c0_i32_1 = arith.constant 0 : i32
    return %c0_i32, %c0_i32_0 : i32, i32
  }
  func.func @transform_11(%arg0: i32, %arg1: i32) -> (i32, i32) {
    %c0_i32 = arith.constant 0 : i32
    %c0_i32_0 = arith.constant 0 : i32
    %c0_i32_1 = arith.constant 0 : i32
    return %c0_i32, %c0_i32_0 : i32, i32
  }
  func.func @transform_12(%arg0: i32, %arg1: i32) -> (i32, i32) {
    %c0_i32 = arith.constant 0 : i32
    %c0_i32_0 = arith.constant 0 : i32
    %c0_i32_1 = arith.constant 0 : i32
    return %c0_i32, %c0_i32_0 : i32, i32
  }
  func.func @transform_13(%arg0: i32, %arg1: i32) -> (i32, i32) {
    %c0_i32 = arith.constant 0 : i32
    %c0_i32_0 = arith.constant 0 : i32
    %c0_i32_1 = arith.constant 0 : i32
    return %c0_i32, %c0_i32_0 : i32, i32
  }
  func.func @transform_14(%arg0: i32, %arg1: i32) -> (i32, i32) {
    %c0_i32 = arith.constant 0 : i32
    %c0_i32_0 = arith.constant 0 : i32
    %c0_i32_1 = arith.constant 0 : i32
    return %c0_i32, %c0_i32_0 : i32, i32
  }
  func.func @transform_15(%arg0: i32, %arg1: i32) -> (i32, i32) {
    %c0_i32 = arith.constant 0 : i32
    %c0_i32_0 = arith.constant 0 : i32
    %c0_i32_1 = arith.constant 0 : i32
    return %c0_i32, %c0_i32_0 : i32, i32
  }
  func.func @transform_16(%arg0: i32, %arg1: i32) -> (i32, i32, i32) {
    %c0_i32 = arith.constant 0 : i32
    %c0_i32_0 = arith.constant 0 : i32
    return %arg0, %arg1, %c0_i32 : i32, i32, i32
  }
}

</mosaic_0001>

<llo_original>
// kernel: tpu_custom_call.1
$region0: #{tpu_custom_call.1}
  #allocation0 [shape = 'u32[]', space=smem, size = 0x4, offset = 0x4, fixed_abs, tag = 'smem constant byte address 0x4 - core index']
  #allocation1 [shape = 'u32[144,128]{1,0:T(1,128)}', space=vmem, size = 0x12000, scoped, tag = 'internal scratch']
  %s0 = inlined_call_operand.hbm [shape: f32[8,128], index: 0, kind: input, shape index: {}]
  %s1 = inlined_call_operand.hbm [shape: f32[8,128], index: 1, kind: output, shape index: {}]
  %s2 = sld [smem:[#allocation0]]
  $region18: #{tpu_custom_call.1} parent=0
    _
  %s4 = ssub.s32 1, %s2
  %s5 = scalar_select 0, %s4, %s2
  $region1: #{tpu_custom_call.1} parent=0
    #allocation2 [shape = 'u8[4096]{0}', space=vmem, size = 0x1000, scoped, tag = 'input window, operand 0, single buffered']
    #allocation3 [shape = 's32[1]{0}', space=sflag, size = 0x4, scoped, tag = 'scoped memory for tpu_custom_call.1']
    #allocation4 [shape = 's32[1]{0}', space=sflag, size = 0x4, scoped, tag = 'scoped memory for tpu_custom_call.1']
    #allocation5 [shape = 'u8[4096]{0}', space=vmem, size = 0x1000, scoped, tag = 'output window, operand 0, single buffered']
    %6 = vsyncpa [#allocation3], 0
    %7 = vsyncpa [#allocation4], 0
    // Predicated region
    $region2: #{tpu_custom_call.1} parent=1 // pred_check
      _
    $region3: #{tpu_custom_call.1} parent=1 // pred_check_branch
      %9 = sbr.rel (0) target = $region5
    $region4: #{tpu_custom_call.1} parent=1 // pred_region
      %s11 = ssub.s32 128, 128
      %12 = vsyncadd [#allocation3], %s11
      %s14 = sshll.u32 [#allocation2], 4
      %s15 = int_to_ptr.vmem [resolvable:$true] %s14
      %17 = dma.hbm_to_vmem [thread:$0]  %s0, 128, %s15, [#allocation3]
    $region5: #{tpu_custom_call.1} parent=1 // pred_fallthru
      _
    // Predicated region
    $region6: #{tpu_custom_call.1} parent=1 // pred_check
      _
    $region7: #{tpu_custom_call.1} parent=1 // pred_check_branch
      %19 = sbr.rel (0) target = $region9
    $region8: #{tpu_custom_call.1} parent=1 // pred_region
      %20 = dma.done [#allocation3], 128
    $region9: #{tpu_custom_call.1} parent=1 // pred_fallthru
      _
    %v21 = vld [vmem:[#allocation2] sm:$0xff]
    %22 = vst [vmem:[#allocation5] sm:$0xff] %v21
    // Predicated region
    $region10: #{tpu_custom_call.1} parent=1 // pred_check
      _
    $region11: #{tpu_custom_call.1} parent=1 // pred_check_branch
      %24 = sbr.rel (0) target = $region13
    $region12: #{tpu_custom_call.1} parent=1 // pred_region
      %s26 = ssub.s32 128, 128
      %27 = vsyncadd [#allocation4], %s26
      %s29 = sshll.u32 [#allocation5], 4
      %s30 = int_to_ptr.vmem [resolvable:$true] %s29
      %32 = dma.vmem_to_hbm [thread:$0]  %s30, 128, %s1, [#allocation4]
    $region13: #{tpu_custom_call.1} parent=1 // pred_fallthru
      _
    // Predicated region
    $region14: #{tpu_custom_call.1} parent=1 // pred_check
      _
    $region15: #{tpu_custom_call.1} parent=1 // pred_check_branch
      %34 = sbr.rel (0) target = $region17
    $region16: #{tpu_custom_call.1} parent=1 // pred_region
      %35 = dma.done [#allocation4], 128
    $region17: #{tpu_custom_call.1} parent=1 // pred_fallthru
      _
    %36 = vsyncpa [#allocation3], 1
    %37 = vsyncpa [#allocation4], 1

// kernel: tpu_custom_call.1
$region0: #{tpu_custom_call.1}
  #allocation0 [shape = 'u32[]', space=smem, size = 0x4, offset = 0x4, fixed_abs, tag = 'smem constant byte address 0x4 - core index']
  #allocation1 [shape = 'u32[144,128]{1,0:T(1,128)}', space=vmem, size = 0x12000, scoped, tag = 'internal scratch']
  #allocation2 [shape = 'f32[2,8,32]{2,1,0:T(8,128)}', space=vmem, size = 0x2000, scoped, tag = 'scratch operand']
  %s0 = inlined_call_operand.vmem [shape: f32[2,8,32], index: 0, kind: input, shape index: {}]
  %s1 = inlined_call_operand.vmem [shape: bf16[2,8,8], index: 1, kind: input, shape index: {}]
  %s2 = inlined_call_operand.vmem [shape: f32[32,32], index: 2, kind: input, shape index: {}]
  %s3 = inlined_call_operand.vmem [shape: f32[1,32], index: 3, kind: input, shape index: {}]
  %s4 = inlined_call_operand.vmem [shape: f32[32,64], index: 4, kind: input, shape index: {}]
  %s5 = inlined_call_operand.vmem [shape: f32[1,64], index: 5, kind: input, shape index: {}]
  %s6 = inlined_call_operand.vmem [shape: f32[32,32], index: 6, kind: input, shape index: {}]
  %s7 = inlined_call_operand.vmem [shape: f32[1,32], index: 7, kind: input, shape index: {}]
  %s8 = inlined_call_operand.vmem [shape: f32[1,32], index: 8, kind: input, shape index: {}]
  %s9 = inlined_call_operand.vmem [shape: f32[1,32], index: 9, kind: input, shape index: {}]
  %s10 = inlined_call_operand.vmem [shape: f32[32,128], index: 10, kind: input, shape index: {}]
  %s11 = inlined_call_operand.vmem [shape: f32[1,128], index: 11, kind: input, shape index: {}]
  %s12 = inlined_call_operand.vmem [shape: f32[128,32], index: 12, kind: input, shape index: {}]
  %s13 = inlined_call_operand.vmem [shape: f32[1,32], index: 13, kind: input, shape index: {}]
  %s14 = inlined_call_operand.vmem [shape: f32[1,32], index: 14, kind: input, shape index: {}]
  %s15 = inlined_call_operand.vmem [shape: f32[1,32], index: 15, kind: input, shape index: {}]
  %s16 = inlined_call_operand.hbm [shape: f32[2,8,32], index: 16, kind: output, shape index: {}]
  %s17 = sld [smem:[#allocation0]]
  $region101: #{tpu_custom_call.1} parent=0
    _
  %s19 = ssub.s32 1, %s17
  %s20 = scalar_select 0, %s19, %s17
  $region1: #{tpu_custom_call.1} parent=0
    #allocation3 [shape = 'u8[8192]{0}', space=vmem, size = 0x2000, scoped, tag = 'output window, operand 0']
    #allocation4 [shape = 's32[2]{0}', space=sflag, size = 0x8, scoped, tag = 'scoped memory for tpu_custom_call.1']
    %21 = vsyncpa [#allocation4], 0
    %s22 = scalar_lea.sflag [#allocation4], 1
    %23 = vsyncpa %s22, 0
    loop: start=0, step=1, limit=4
    $region2: #{tpu_custom_call.1} parent=1 // loop_pre_header
      _
    $region3: #{tpu_custom_call.1} parent=1 // loop_header
      %s25 = sphi 0, %s29
      %p26 = scmp.ge.s32.totalorder %s25, 4
      %s32 = sphi 0, %s44
      %s33 = sphi 0, %s40
      %s34 = sphi 0, %s32
      %s35 = sphi 0, %s33
      %s36 = sphi 0, %s34
      %s37 = sphi 0, %s35
      %s47 = sphi 0, %s49
      %s50 = sphi 0, %s47
      %s51 = sphi 0, %s50
      %s67 = sphi 0, %s51
      %s75 = sphi 0, %s77
      %s78 = sphi 0, %s75
      %s79 = sphi 0, %s78
      %s95 = sphi 0, %s79
      %s99 = sphi 0, %s99
      %s101 = sphi 0, %s99
      %s102 = sphi 0, %s101
      %s116 = sphi 0, %s102
      %s120 = sphi 0, %s120
      %s122 = sphi 0, %s120
      %s123 = sphi 0, %s122
      %s137 = sphi 0, %s123
      %s141 = sphi 0, %s141
      %s143 = sphi 0, %s141
      %s144 = sphi 0, %s143
      %s158 = sphi 0, %s144
      %s162 = sphi 0, %s162
      %s164 = sphi 0, %s162
      %s165 = sphi 0, %s164
      %s179 = sphi 0, %s165
      %s183 = sphi 0, %s183
      %s185 = sphi 0, %s183
      %s186 = sphi 0, %s185
      %s200 = sphi 0, %s186
      %s204 = sphi 0, %s204
      %s206 = sphi 0, %s204
      %s207 = sphi 0, %s206
      %s221 = sphi 0, %s207
      %s225 = sphi 0, %s225
      %s227 = sphi 0, %s225
      %s228 = sphi 0, %s227
      %s242 = sphi 0, %s228
      %s246 = sphi 0, %s246
      %s248 = sphi 0, %s246
      %s249 = sphi 0, %s248
      %s263 = sphi 0, %s249
      %s267 = sphi 0, %s267
      %s269 = sphi 0, %s267
      %s270 = sphi 0, %s269
      %s284 = sphi 0, %s270
      %s288 = sphi 0, %s288
      %s290 = sphi 0, %s288
      %s291 = sphi 0, %s290
      %s305 = sphi 0, %s291
      %s309 = sphi 0, %s309
      %s311 = sphi 0, %s309
      %s312 = sphi 0, %s311
      %s326 = sphi 0, %s312
      %s330 = sphi 0, %s330
      %s332 = sphi 0, %s330
      %s333 = sphi 0, %s332
      %s347 = sphi 0, %s333
      %s351 = sphi 0, %s351
      %s353 = sphi 0, %s351
      %s354 = sphi 0, %s353
      %s368 = sphi 0, %s354
      %s372 = sphi 0, %s372
      %s374 = sphi 0, %s372
      %s375 = sphi 0, %s374
      %s389 = sphi 0, %s375
      %s397 = sphi 0, %s399
      %s400 = sphi 0, %s397
      %s401 = sphi 0, %s400
      %s417 = sphi 0, %s401
    $region4: #{tpu_custom_call.1} parent=1 // loop_header_branch
      %28 = sbr.rel (%p26) target = $region8
    $region5: #{tpu_custom_call.1} parent=1 // loop_body
      %s30 = ssub.s32 %s25, 1
      %s31 = ssub.s32 %s25, 2
      %s38 = sadd.s32 1, %s33
      %p39 = scmp.ge.s32.totalorder %s38, 1
      %s40 = scalar_select %p39, 0, %s38
      %s41 = sadd.s32 1, %s32
      %s42 = scalar_select %p39, %s41, %s32
      %p43 = scmp.ge.s32.totalorder %s42, 2
      %s44 = scalar_select %p43, 0, %s42
      %s45 = ssub.s32 %s32, %s44
      %p46 = scmp.eq.s32.totalorder %s45, 0
      %s48 = sadd.s32 %s47, 1
      %s49 = scalar_select %p46, %s47, %s48
      %p52 = pneg %p46
      %p53 = scmp.eq.s32.totalorder %s25, 1
      %p54 = por %p52, %p53
      %p55 = scmp.ne.s32.totalorder %s47, %s50
      %p56 = scmp.eq.s32.totalorder %s25, 0
      %p57 = por %p55, %p56
      %p58 = scmp.ne.s32.totalorder %s47, %s50
      %p59 = scmp.eq.s32.totalorder %s30, 1
      %p60 = por %p58, %p59
      %p61 = scmp.ne.s32.totalorder %s50, %s51
      %p62 = scmp.eq.s32.totalorder %s30, 0
      %p63 = por %p61, %p62
      %p64 = scmp.ne.s32.totalorder %s50, %s51
      %p65 = scmp.eq.s32.totalorder %s31, 1
      %p66 = por %p64, %p65
      %p68 = scmp.ne.s32.totalorder %s51, %s67
      %p69 = scmp.eq.s32.totalorder %s31, 0
      %p70 = por %p68, %p69
      %s71 = ssub.s32 %s32, %s44
      %s72 = ssub.s32 %s33, %s40
      %s73 = sor.u32 %s71, %s72
      %p74 = scmp.eq.s32.totalorder %s73, 0
      %s76 = sadd.s32 %s75, 1
      %s77 = scalar_select %p74, %s75, %s76
      %p80 = pneg %p74
      %p81 = scmp.eq.s32.totalorder %s25, 1
      %p82 = por %p80, %p81
      %p83 = scmp.ne.s32.totalorder %s75, %s78
      %p84 = scmp.eq.s32.totalorder %s25, 0
      %p85 = por %p83, %p84
      %p86 = scmp.ne.s32.totalorder %s75, %s78
      %p87 = scmp.eq.s32.totalorder %s30, 1
      %p88 = por %p86, %p87
      %p89 = scmp.ne.s32.totalorder %s78, %s79
      %p90 = scmp.eq.s32.totalorder %s30, 0
      %p91 = por %p89, %p90
      %p92 = scmp.ne.s32.totalorder %s78, %s79
      %p93 = scmp.eq.s32.totalorder %s31, 1
      %p94 = por %p92, %p93
      %p96 = scmp.ne.s32.totalorder %s79, %s95
      %p97 = scmp.eq.s32.totalorder %s31, 0
      %p98 = por %p96, %p97
      %s100 = sadd.s32 %s99, 1
      %p103 = scmp.eq.s32.totalorder %s25, 1
      %p104 = scmp.ne.s32.totalorder %s99, %s101
      %p105 = scmp.eq.s32.totalorder %s25, 0
      %p106 = por %p104, %p105
      %p107 = scmp.ne.s32.totalorder %s99, %s101
      %p108 = scmp.eq.s32.totalorder %s30, 1
      %p109 = por %p107, %p108
      %p110 = scmp.ne.s32.totalorder %s101, %s102
      %p111 = scmp.eq.s32.totalorder %s30, 0
      %p112 = por %p110, %p111
      %p113 = scmp.ne.s32.totalorder %s101, %s102
      %p114 = scmp.eq.s32.totalorder %s31, 1
      %p115 = por %p113, %p114
      %p117 = scmp.ne.s32.totalorder %s102, %s116
      %p118 = scmp.eq.s32.totalorder %s31, 0
      %p119 = por %p117, %p118
      %s121 = sadd.s32 %s120, 1
      %p124 = scmp.eq.s32.totalorder %s25, 1
      %p125 = scmp.ne.s32.totalorder %s120, %s122
      %p126 = scmp.eq.s32.totalorder %s25, 0
      %p127 = por %p125, %p126
      %p128 = scmp.ne.s32.totalorder %s120, %s122
      %p129 = scmp.eq.s32.totalorder %s30, 1
      %p130 = por %p128, %p129
      %p131 = scmp.ne.s32.totalorder %s122, %s123
      %p132 = scmp.eq.s32.totalorder %s30, 0
      %p133 = por %p131, %p132
      %p134 = scmp.ne.s32.totalorder %s122, %s123
      %p135 = scmp.eq.s32.totalorder %s31, 1
      %p136 = por %p134, %p135
      %p138 = scmp.ne.s32.totalorder %s123, %s137
      %p139 = scmp.eq.s32.totalorder %s31, 0
      %p140 = por %p138, %p139
      %s142 = sadd.s32 %s141, 1
      %p145 = scmp.eq.s32.totalorder %s25, 1
      %p146 = scmp.ne.s32.totalorder %s141, %s143
      %p147 = scmp.eq.s32.totalorder %s25, 0
      %p148 = por %p146, %p147
      %p149 = scmp.ne.s32.totalorder %s141, %s143
      %p150 = scmp.eq.s32.totalorder %s30, 1
      %p151 = por %p149, %p150
      %p152 = scmp.ne.s32.totalorder %s143, %s144
      %p153 = scmp.eq.s32.totalorder %s30, 0
      %p154 = por %p152, %p153
      %p155 = scmp.ne.s32.totalorder %s143, %s144
      %p156 = scmp.eq.s32.totalorder %s31, 1
      %p157 = por %p155, %p156
      %p159 = scmp.ne.s32.totalorder %s144, %s158
      %p160 = scmp.eq.s32.totalorder %s31, 0
      %p161 = por %p159, %p160
      %s163 = sadd.s32 %s162, 1
      %p166 = scmp.eq.s32.totalorder %s25, 1
      %p167 = scmp.ne.s32.totalorder %s162, %s164
      %p168 = scmp.eq.s32.totalorder %s25, 0
      %p169 = por %p167, %p168
      %p170 = scmp.ne.s32.totalorder %s162, %s164
      %p171 = scmp.eq.s32.totalorder %s30, 1
      %p172 = por %p170, %p171
      %p173 = scmp.ne.s32.totalorder %s164, %s165
      %p174 = scmp.eq.s32.totalorder %s30, 0
      %p175 = por %p173, %p174
      %p176 = scmp.ne.s32.totalorder %s164, %s165
      %p177 = scmp.eq.s32.totalorder %s31, 1
      %p178 = por %p176, %p177
      %p180 = scmp.ne.s32.totalorder %s165, %s179
      %p181 = scmp.eq.s32.totalorder %s31, 0
      %p182 = por %p180, %p181
      %s184 = sadd.s32 %s183, 1
      %p187 = scmp.eq.s32.totalorder %s25, 1
      %p188 = scmp.ne.s32.totalorder %s183, %s185
      %p189 = scmp.eq.s32.totalorder %s25, 0
      %p190 = por %p188, %p189
      %p191 = scmp.ne.s32.totalorder %s183, %s185
      %p192 = scmp.eq.s32.totalorder %s30, 1
      %p193 = por %p191, %p192
      %p194 = scmp.ne.s32.totalorder %s185, %s186
      %p195 = scmp.eq.s32.totalorder %s30, 0
      %p196 = por %p194, %p195
      %p197 = scmp.ne.s32.totalorder %s185, %s186
      %p198 = scmp.eq.s32.totalorder %s31, 1
      %p199 = por %p197, %p198
      %p201 = scmp.ne.s32.totalorder %s186, %s200
      %p202 = scmp.eq.s32.totalorder %s31, 0
      %p203 = por %p201, %p202
      %s205 = sadd.s32 %s204, 1
      %p208 = scmp.eq.s32.totalorder %s25, 1
      %p209 = scmp.ne.s32.totalorder %s204, %s206
      %p210 = scmp.eq.s32.totalorder %s25, 0
      %p211 = por %p209, %p210
      %p212 = scmp.ne.s32.totalorder %s204, %s206
      %p213 = scmp.eq.s32.totalorder %s30, 1
      %p214 = por %p212, %p213
      %p215 = scmp.ne.s32.totalorder %s206, %s207
      %p216 = scmp.eq.s32.totalorder %s30, 0
      %p217 = por %p215, %p216
      %p218 = scmp.ne.s32.totalorder %s206, %s207
      %p219 = scmp.eq.s32.totalorder %s31, 1
      %p220 = por %p218, %p219
      %p222 = scmp.ne.s32.totalorder %s207, %s221
      %p223 = scmp.eq.s32.totalorder %s31, 0
      %p224 = por %p222, %p223
      %s226 = sadd.s32 %s225, 1
      %p229 = scmp.eq.s32.totalorder %s25, 1
      %p230 = scmp.ne.s32.totalorder %s225, %s227
      %p231 = scmp.eq.s32.totalorder %s25, 0
      %p232 = por %p230, %p231
      %p233 = scmp.ne.s32.totalorder %s225, %s227
      %p234 = scmp.eq.s32.totalorder %s30, 1
      %p235 = por %p233, %p234
      %p236 = scmp.ne.s32.totalorder %s227, %s228
      %p237 = scmp.eq.s32.totalorder %s30, 0
      %p238 = por %p236, %p237
      %p239 = scmp.ne.s32.totalorder %s227, %s228
      %p240 = scmp.eq.s32.totalorder %s31, 1
      %p241 = por %p239, %p240
      %p243 = scmp.ne.s32.totalorder %s228, %s242
      %p244 = scmp.eq.s32.totalorder %s31, 0
      %p245 = por %p243, %p244
      %s247 = sadd.s32 %s246, 1
      %p250 = scmp.eq.s32.totalorder %s25, 1
      %p251 = scmp.ne.s32.totalorder %s246, %s248
      %p252 = scmp.eq.s32.totalorder %s25, 0
      %p253 = por %p251, %p252
      %p254 = scmp.ne.s32.totalorder %s246, %s248
      %p255 = scmp.eq.s32.totalorder %s30, 1
      %p256 = por %p254, %p255
      %p257 = scmp.ne.s32.totalorder %s248, %s249
      %p258 = scmp.eq.s32.totalorder %s30, 0
      %p259 = por %p257, %p258
      %p260 = scmp.ne.s32.totalorder %s248, %s249
      %p261 = scmp.eq.s32.totalorder %s31, 1
      %p262 = por %p260, %p261
      %p264 = scmp.ne.s32.totalorder %s249, %s263
      %p265 = scmp.eq.s32.totalorder %s31, 0
      %p266 = por %p264, %p265
      %s268 = sadd.s32 %s267, 1
      %p271 = scmp.eq.s32.totalorder %s25, 1
      %p272 = scmp.ne.s32.totalorder %s267, %s269
      %p273 = scmp.eq.s32.totalorder %s25, 0
      %p274 = por %p272, %p273
      %p275 = scmp.ne.s32.totalorder %s267, %s269
      %p276 = scmp.eq.s32.totalorder %s30, 1
      %p277 = por %p275, %p276
      %p278 = scmp.ne.s32.totalorder %s269, %s270
      %p279 = scmp.eq.s32.totalorder %s30, 0
      %p280 = por %p278, %p279
      %p281 = scmp.ne.s32.totalorder %s269, %s270
      %p282 = scmp.eq.s32.totalorder %s31, 1
      %p283 = por %p281, %p282
      %p285 = scmp.ne.s32.totalorder %s270, %s284
      %p286 = scmp.eq.s32.totalorder %s31, 0
      %p287 = por %p285, %p286
      %s289 = sadd.s32 %s288, 1
      %p292 = scmp.eq.s32.totalorder %s25, 1
      %p293 = scmp.ne.s32.totalorder %s288, %s290
      %p294 = scmp.eq.s32.totalorder %s25, 0
      %p295 = por %p293, %p294
      %p296 = scmp.ne.s32.totalorder %s288, %s290
      %p297 = scmp.eq.s32.totalorder %s30, 1
      %p298 = por %p296, %p297
      %p299 = scmp.ne.s32.totalorder %s290, %s291
      %p300 = scmp.eq.s32.totalorder %s30, 0
      %p301 = por %p299, %p300
      %p302 = scmp.ne.s32.totalorder %s290, %s291
      %p303 = scmp.eq.s32.totalorder %s31, 1
      %p304 = por %p302, %p303
      %p306 = scmp.ne.s32.totalorder %s291, %s305
      %p307 = scmp.eq.s32.totalorder %s31, 0
      %p308 = por %p306, %p307
      %s310 = sadd.s32 %s309, 1
      %p313 = scmp.eq.s32.totalorder %s25, 1
      %p314 = scmp.ne.s32.totalorder %s309, %s311
      %p315 = scmp.eq.s32.totalorder %s25, 0
      %p316 = por %p314, %p315
      %p317 = scmp.ne.s32.totalorder %s309, %s311
      %p318 = scmp.eq.s32.totalorder %s30, 1
      %p319 = por %p317, %p318
      %p320 = scmp.ne.s32.totalorder %s311, %s312
      %p321 = scmp.eq.s32.totalorder %s30, 0
      %p322 = por %p320, %p321
      %p323 = scmp.ne.s32.totalorder %s311, %s312
      %p324 = scmp.eq.s32.totalorder %s31, 1
      %p325 = por %p323, %p324
      %p327 = scmp.ne.s32.totalorder %s312, %s326
      %p328 = scmp.eq.s32.totalorder %s31, 0
      %p329 = por %p327, %p328
      %s331 = sadd.s32 %s330, 1
      %p334 = scmp.eq.s32.totalorder %s25, 1
      %p335 = scmp.ne.s32.totalorder %s330, %s332
      %p336 = scmp.eq.s32.totalorder %s25, 0
      %p337 = por %p335, %p336
      %p338 = scmp.ne.s32.totalorder %s330, %s332
      %p339 = scmp.eq.s32.totalorder %s30, 1
      %p340 = por %p338, %p339
      %p341 = scmp.ne.s32.totalorder %s332, %s333
      %p342 = scmp.eq.s32.totalorder %s30, 0
      %p343 = por %p341, %p342
      %p344 = scmp.ne.s32.totalorder %s332, %s333
      %p345 = scmp.eq.s32.totalorder %s31, 1
      %p346 = por %p344, %p345
      %p348 = scmp.ne.s32.totalorder %s333, %s347
      %p349 = scmp.eq.s32.totalorder %s31, 0
      %p350 = por %p348, %p349
      %s352 = sadd.s32 %s351, 1
      %p355 = scmp.eq.s32.totalorder %s25, 1
      %p356 = scmp.ne.s32.totalorder %s351, %s353
      %p357 = scmp.eq.s32.totalorder %s25, 0
      %p358 = por %p356, %p357
      %p359 = scmp.ne.s32.totalorder %s351, %s353
      %p360 = scmp.eq.s32.totalorder %s30, 1
      %p361 = por %p359, %p360
      %p362 = scmp.ne.s32.totalorder %s353, %s354
      %p363 = scmp.eq.s32.totalorder %s30, 0
      %p364 = por %p362, %p363
      %p365 = scmp.ne.s32.totalorder %s353, %s354
      %p366 = scmp.eq.s32.totalorder %s31, 1
      %p367 = por %p365, %p366
      %p369 = scmp.ne.s32.totalorder %s354, %s368
      %p370 = scmp.eq.s32.totalorder %s31, 0
      %p371 = por %p369, %p370
      %s373 = sadd.s32 %s372, 1
      %p376 = scmp.eq.s32.totalorder %s25, 1
      %p377 = scmp.ne.s32.totalorder %s372, %s374
      %p378 = scmp.eq.s32.totalorder %s25, 0
      %p379 = por %p377, %p378
      %p380 = scmp.ne.s32.totalorder %s372, %s374
      %p381 = scmp.eq.s32.totalorder %s30, 1
      %p382 = por %p380, %p381
      %p383 = scmp.ne.s32.totalorder %s374, %s375
      %p384 = scmp.eq.s32.totalorder %s30, 0
      %p385 = por %p383, %p384
      %p386 = scmp.ne.s32.totalorder %s374, %s375
      %p387 = scmp.eq.s32.totalorder %s31, 1
      %p388 = por %p386, %p387
      %p390 = scmp.ne.s32.totalorder %s375, %s389
      %p391 = scmp.eq.s32.totalorder %s31, 0
      %p392 = por %p390, %p391
      %s393 = ssub.s32 %s32, %s44
      %s394 = ssub.s32 %s33, %s40
      %s395 = sor.u32 %s393, %s394
      %p396 = scmp.eq.s32.totalorder %s395, 0
      %s398 = sadd.s32 %s397, 1
      %s399 = scalar_select %p396, %s397, %s398
      %p402 = pneg %p396
      %p403 = scmp.eq.s32.totalorder %s25, 1
      %p404 = por %p402, %p403
      %p405 = scmp.ne.s32.totalorder %s397, %s400
      %p406 = scmp.eq.s32.totalorder %s25, 0
      %p407 = por %p405, %p406
      %p408 = scmp.ne.s32.totalorder %s397, %s400
      %p409 = scmp.eq.s32.totalorder %s30, 1
      %p410 = por %p408, %p409
      %p411 = scmp.ne.s32.totalorder %s400, %s401
      %p412 = scmp.eq.s32.totalorder %s30, 0
      %p413 = por %p411, %p412
      %p414 = scmp.ne.s32.totalorder %s400, %s401
      %p415 = scmp.eq.s32.totalorder %s31, 1
      %p416 = por %p414, %p415
      %p418 = scmp.ne.s32.totalorder %s401, %s417
      %p419 = scmp.eq.s32.totalorder %s31, 0
      %p420 = por %p418, %p419
      %p421 = scmp.le.s32.totalorder 1, %s25
      %p422 = scmp.lt.s32.totalorder %s25, 3
      %p423 = pnand %p421, %p422
      %p424 = pneg %p423
      // Predicated region
      $region9: #{tpu_custom_call.1} parent=5 // pred_check
        _
      $region10: #{tpu_custom_call.1} parent=5 // pred_check_branch
        %426 = sbr.rel (%p423) target = $region12
      $region11: #{tpu_custom_call.1} parent=5 // pred_region
        %s427 = ssub.s32 %s25, 1
        // Predicated region
        $region13: #{tpu_custom_call.1} parent=11 // pred_check
          %p428 = pneg %p112
        $region14: #{tpu_custom_call.1} parent=11 // pred_check_branch
          %430 = sbr.rel (%p428) target = $region16
        $region15: #{tpu_custom_call.1} parent=11 // pred_region
          _
        $region16: #{tpu_custom_call.1} parent=11 // pred_fallthru
          _
        // Predicated region
        $region17: #{tpu_custom_call.1} parent=11 // pred_check
          %p431 = pneg %p133
        $region18: #{tpu_custom_call.1} parent=11 // pred_check_branch
          %433 = sbr.rel (%p431) target = $region20
        $region19: #{tpu_custom_call.1} parent=11 // pred_region
          _
        $region20: #{tpu_custom_call.1} parent=11 // pred_fallthru
          _
        // Predicated region
        $region21: #{tpu_custom_call.1} parent=11 // pred_check
          %p434 = pneg %p154
        $region22: #{tpu_custom_call.1} parent=11 // pred_check_branch
          %436 = sbr.rel (%p434) target = $region24
        $region23: #{tpu_custom_call.1} parent=11 // pred_region
          _
        $region24: #{tpu_custom_call.1} parent=11 // pred_fallthru
          _
        // Predicated region
        $region25: #{tpu_custom_call.1} parent=11 // pred_check
          %p437 = pneg %p175
        $region26: #{tpu_custom_call.1} parent=11 // pred_check_branch
          %439 = sbr.rel (%p437) target = $region28
        $region27: #{tpu_custom_call.1} parent=11 // pred_region
          _
        $region28: #{tpu_custom_call.1} parent=11 // pred_fallthru
          _
        // Predicated region
        $region29: #{tpu_custom_call.1} parent=11 // pred_check
          %p440 = pneg %p196
        $region30: #{tpu_custom_call.1} parent=11 // pred_check_branch
          %442 = sbr.rel (%p440) target = $region32
        $region31: #{tpu_custom_call.1} parent=11 // pred_region
          _
        $region32: #{tpu_custom_call.1} parent=11 // pred_fallthru
          _
        // Predicated region
        $region33: #{tpu_custom_call.1} parent=11 // pred_check
          %p443 = pneg %p217
        $region34: #{tpu_custom_call.1} parent=11 // pred_check_branch
          %445 = sbr.rel (%p443) target = $region36
        $region35: #{tpu_custom_call.1} parent=11 // pred_region
          _
        $region36: #{tpu_custom_call.1} parent=11 // pred_fallthru
          _
        // Predicated region
        $region37: #{tpu_custom_call.1} parent=11 // pred_check
          %p446 = pneg %p238
        $region38: #{tpu_custom_call.1} parent=11 // pred_check_branch
          %448 = sbr.rel (%p446) target = $region40
        $region39: #{tpu_custom_call.1} parent=11 // pred_region
          _
        $region40: #{tpu_custom_call.1} parent=11 // pred_fallthru
          _
        // Predicated region
        $region41: #{tpu_custom_call.1} parent=11 // pred_check
          %p449 = pneg %p259
        $region42: #{tpu_custom_call.1} parent=11 // pred_check_branch
          %451 = sbr.rel (%p449) target = $region44
        $region43: #{tpu_custom_call.1} parent=11 // pred_region
          _
        $region44: #{tpu_custom_call.1} parent=11 // pred_fallthru
          _
        // Predicated region
        $region45: #{tpu_custom_call.1} parent=11 // pred_check
          %p452 = pneg %p280
        $region46: #{tpu_custom_call.1} parent=11 // pred_check_branch
          %454 = sbr.rel (%p452) target = $region48
        $region47: #{tpu_custom_call.1} parent=11 // pred_region
          _
        $region48: #{tpu_custom_call.1} parent=11 // pred_fallthru
          _
        // Predicated region
        $region49: #{tpu_custom_call.1} parent=11 // pred_check
          %p455 = pneg %p301
        $region50: #{tpu_custom_call.1} parent=11 // pred_check_branch
          %457 = sbr.rel (%p455) target = $region52
        $region51: #{tpu_custom_call.1} parent=11 // pred_region
          _
        $region52: #{tpu_custom_call.1} parent=11 // pred_fallthru
          _
        // Predicated region
        $region53: #{tpu_custom_call.1} parent=11 // pred_check
          %p458 = pneg %p322
        $region54: #{tpu_custom_call.1} parent=11 // pred_check_branch
          %460 = sbr.rel (%p458) target = $region56
        $region55: #{tpu_custom_call.1} parent=11 // pred_region
          _
        $region56: #{tpu_custom_call.1} parent=11 // pred_fallthru
          _
        // Predicated region
        $region57: #{tpu_custom_call.1} parent=11 // pred_check
          %p461 = pneg %p343
        $region58: #{tpu_custom_call.1} parent=11 // pred_check_branch
          %463 = sbr.rel (%p461) target = $region60
        $region59: #{tpu_custom_call.1} parent=11 // pred_region
          _
        $region60: #{tpu_custom_call.1} parent=11 // pred_fallthru
          _
        // Predicated region
        $region61: #{tpu_custom_call.1} parent=11 // pred_check
          %p464 = pneg %p364
        $region62: #{tpu_custom_call.1} parent=11 // pred_check_branch
          %466 = sbr.rel (%p464) target = $region64
        $region63: #{tpu_custom_call.1} parent=11 // pred_region
          _
        $region64: #{tpu_custom_call.1} parent=11 // pred_fallthru
          _
        // Predicated region
        $region65: #{tpu_custom_call.1} parent=11 // pred_check
          %p467 = pneg %p385
        $region66: #{tpu_custom_call.1} parent=11 // pred_check_branch
          %469 = sbr.rel (%p467) target = $region68
        $region67: #{tpu_custom_call.1} parent=11 // pred_region
          _
        $region68: #{tpu_custom_call.1} parent=11 // pred_fallthru
          _
      $region12: #{tpu_custom_call.1} parent=5 // pred_fallthru
        _
      %p470 = scmp.lt.s32.totalorder %s25, 2
      // Predicated region
      $region69: #{tpu_custom_call.1} parent=5 // pred_check
        %p471 = pneg %p470
      $region70: #{tpu_custom_call.1} parent=5 // pred_check_branch
        %473 = sbr.rel (%p471) target = $region72
      $region71: #{tpu_custom_call.1} parent=5 // pred_region
        // Predicated region
        $region73: #{tpu_custom_call.1} parent=71 // pred_check
          %p474 = pneg %p57
        $region74: #{tpu_custom_call.1} parent=71 // pred_check_branch
          %476 = sbr.rel (%p474) target = $region76
        $region75: #{tpu_custom_call.1} parent=71 // pred_region
          %p477 = scmp.lt.s32.totalorder %s32, 1
          %s478 = scalar_select %p477, %s32, 1
          %s479 = smul.addr %s478, 8
          %s480 = scalar_lea.vmem %s0, %s479
        $region76: #{tpu_custom_call.1} parent=71 // pred_fallthru
          _
        // Predicated region
        $region77: #{tpu_custom_call.1} parent=71 // pred_check
          %p481 = pneg %p85
        $region78: #{tpu_custom_call.1} parent=71 // pred_check_branch
          %483 = sbr.rel (%p481) target = $region80
        $region79: #{tpu_custom_call.1} parent=71 // pred_region
          %p484 = scmp.lt.s32.totalorder %s32, 1
          %s485 = scalar_select %p484, %s32, 1
          %p486 = scmp.lt.s32.totalorder %s33, 0
          %s487 = scalar_select %p486, %s33, 0
          %s488 = sadd.s32 %s487, %s485
          %s489 = smul.addr %s488, 4
          %s490 = scalar_lea.vmem %s1, %s489
        $region80: #{tpu_custom_call.1} parent=71 // pred_fallthru
          _
      $region72: #{tpu_custom_call.1} parent=5 // pred_fallthru
        _
      %p491 = scmp.le.s32.totalorder 1, %s25
      %p492 = scmp.lt.s32.totalorder %s25, 3
      %p493 = pnand %p491, %p492
      %p494 = pneg %p493
      // Predicated region
      $region81: #{tpu_custom_call.1} parent=5 // pred_check
        _
      $region82: #{tpu_custom_call.1} parent=5 // pred_check_branch
        %496 = sbr.rel (%p493) target = $region84
      $region83: #{tpu_custom_call.1} parent=5 // pred_region
        %s497 = ssub.s32 %s25, 1
        %p498 = scmp.lt.s32.totalorder %s34, 1
        %s499 = scalar_select %p498, %s34, 1
        %s500 = smul.addr %s499, 8
        %s501 = scalar_lea.vmem %s0, %s500
        %p502 = pneg %p63
        %p503 = pneg %p60
        %p504 = scmp.lt.s32.totalorder %s34, 1
        %s505 = scalar_select %p504, %s34, 1
        %p506 = scmp.lt.s32.totalorder %s35, 0
        %s507 = scalar_select %p506, %s35, 0
        %s508 = sadd.s32 %s507, %s505
        %s509 = smul.addr %s508, 4
        %s510 = scalar_lea.vmem %s1, %s509
        %p511 = pneg %p91
        %p512 = pneg %p88
        %p513 = pneg %p112
        %p514 = pneg %p109
        %p515 = pneg %p133
        %p516 = pneg %p130
        %p517 = pneg %p154
        %p518 = pneg %p151
        %p519 = pneg %p175
        %p520 = pneg %p172
        %p521 = pneg %p196
        %p522 = pneg %p193
        %p523 = pneg %p217
        %p524 = pneg %p214
        %p525 = pneg %p238
        %p526 = pneg %p235
        %p527 = pneg %p259
        %p528 = pneg %p256
        %p529 = pneg %p280
        %p530 = pneg %p277
        %p531 = pneg %p301
        %p532 = pneg %p298
        %p533 = pneg %p322
        %p534 = pneg %p319
        %p535 = pneg %p343
        %p536 = pneg %p340
        %p537 = pneg %p364
        %p538 = pneg %p361
        %p539 = pneg %p385
        %p540 = pneg %p382
        %p541 = pneg %p413
        %p542 = pneg %p410
        %s543 = sand.u32 %s400, 1
        %s544 = scalar_lea.sflag [#allocation4], %s543
        %s545 = sand.u32 %s400, 1
        %s546 = smul.addr %s545, 8
        %s547 = scalar_lea.vmem [#allocation3], %s546
        %p548 = scmp.lt.s32.totalorder %s34, 1
        %s549 = scalar_select %p548, %s34, 1
        %s550 = smul.addr %s549, 8
        %s551 = scalar_lea.vmem %s0, %s550
        %p552 = scmp.lt.s32.totalorder %s34, 1
        %s553 = scalar_select %p552, %s34, 1
        %p554 = scmp.lt.s32.totalorder %s35, 0
        %s555 = scalar_select %p554, %s35, 0
        %s556 = sadd.s32 %s555, %s553
        %s557 = smul.addr %s556, 4
        %s558 = scalar_lea.vmem %s1, %s557
        %p559 = scmp.eq.s32.totalorder %s35, 0
        // Predicated region
        $region85: #{tpu_custom_call.1} parent=83 // pred_check
          %p560 = pneg %p559
        $region86: #{tpu_custom_call.1} parent=83 // pred_check_branch
          %562 = sbr.rel (%p560) target = $region88
        $region87: #{tpu_custom_call.1} parent=83 // pred_region
          %v563 = vld [vmem:[%s551] sm:$0xff]
          %v564 = vld [vmem:[%s4] sm:$0xff]
          %v565 = vld [vmem:[%s4 + $0x8] sm:$0xff]
          %v566 = vld [vmem:[%s4 + $0x10] sm:$0xff]
          %v567 = vld [vmem:[%s4 + $0x18] sm:$0xff]
          %v568 = vld [vmem:[%s5] sm:$0x1]
          %v570 = vlaneseq
          %v571 = vshrl.u32 %v570, 7
          %v572 = vsub.s32 0, %v571
          %v573 = vrot.slane %v568, %v572
          %vm575 = vcmask 261120
          %v577 = vsel %vm575, %v563, 0
          %579 = vmatprep.subr.mxu0 0.0
          %580 = vmatpush1.msra.mxu0 %v564
          %581 = vmatprep.subr.mxu0 0.0
          %582 = vmatpush1.msra.mxu0 %v565
          %583 = vmatprep.subr.mxu0 0.0
          %584 = vmatpush1.msra.mxu0 %v566
          %585 = vmatprep.subr.mxu0 0.0
          %586 = vmatpush1.msra.mxu0 %v567
          %587 = vmatprep.subr.mxu0 0.0
          %588 = vmatpush1.msra.mxu0 0.0
          %589 = vmatprep.subr.mxu0 0.0
          %590 = vmatpush1.msra.mxu0 0.0
          %591 = vmatprep.subr.mxu0 0.0
          %592 = vmatpush1.msra.mxu0 0.0
          %593 = vmatprep.subr.mxu0 0.0
          %594 = vmatpush1.msra.mxu0 0.0
          %595 = vmatprep.subr.mxu0 0.0
          %596 = vmatpush1.msra.mxu0 0.0
          %597 = vmatprep.subr.mxu0 0.0
          %598 = vmatpush1.msra.mxu0 0.0
          %599 = vmatprep.subr.mxu0 0.0
          %600 = vmatpush1.msra.mxu0 0.0
          %601 = vmatprep.subr.mxu0 0.0
          %602 = vmatpush1.msra.mxu0 0.0
          %603 = vmatprep.subr.mxu0 0.0
          %604 = vmatpush1.msra.mxu0 0.0
          %605 = vmatprep.subr.mxu0 0.0
          %606 = vmatpush1.msra.mxu0 0.0
          %607 = vmatprep.subr.mxu0 0.0
          %608 = vmatpush1.msra.mxu0 0.0
          %609 = vmatprep.subr.mxu0 0.0
          %610 = vmatpush1.msra.mxu0 0.0
          %611 = vmatprep.subr.mxu0 0.0
          %612 = vmatpush1.msra.mxu0 0.0
          %613 = vmatprep.subr.mxu0 0.0
          %614 = vmatpush1.msra.mxu0 0.0
          %615 = vmatprep.subr.mxu0 0.0
          %616 = vmatpush1.msra.mxu0 0.0
          %617 = vmatprep.subr.mxu0 0.0
          %618 = vmatpush1.msra.mxu0 0.0
          %619 = vmatprep.subr.mxu0 0.0
          %620 = vmatpush1.msra.mxu0 0.0
          %621 = vmatprep.subr.mxu0 0.0
          %622 = vmatpush1.msra.mxu0 0.0
          %623 = vmatprep.subr.mxu0 0.0
          %624 = vmatpush1.msra.mxu0 0.0
          %625 = vmatprep.subr.mxu0 0.0
          %626 = vmatpush1.msra.mxu0 0.0
          %627 = vmatprep.subr.mxu0 0.0
          %628 = vmatpush1.msra.mxu0 0.0
          %629 = vmatprep.subr.mxu0 0.0
          %630 = vmatpush1.msra.mxu0 0.0
          %631 = vmatprep.subr.mxu0 0.0
          %632 = vmatpush1.msra.mxu0 0.0
          %633 = vmatprep.subr.mxu0 0.0
          %634 = vmatpush1.msra.mxu0 0.0
          %635 = vmatprep.subr.mxu0 0.0
          %636 = vmatpush1.msra.mxu0 0.0
          %637 = vmatprep.subr.mxu0 0.0
          %638 = vmatpush1.msra.mxu0 0.0
          %639 = vmatprep.subr.mxu0 0.0
          %640 = vmatpush1.msra.mxu0 0.0
          %641 = vmatprep.subr.mxu0 0.0
          %642 = vmatpush1.msra.mxu0 0.0
          %643 = vmatprep.mubr.f32.mxu0 0.0
          %644 = vmatmul.mubr.f32.gmra.mrb[0].mxu0 %v577
          %v645 = vpop.f32.mrb[0].mxu0
          %v646 = vadd.f32 %v573, %v645
          %v647 = vpop.f32.mrb[0].mxu0
          %648 = vdwg.mxu0
          %650 = vrot.lane.b32.xlu0 %v646, 112
          %v651 = vpop.permute.xlu0 %650
          %v653 = vcombine.high %v646, 0.0
          %v655 = vunpack.c.l.s4 1983009808
          %v656 = vunpack.c.0.s8 %v655
          %v657 = vlaneseq
          %v658 = vshrl.u32 %v657, 7
          %v659 = vsub.s32 %v656, %v658
          %v660 = vrot.slane %v646, %v659
          %v662 = vunpack.c.l.s4 1983009808
          %v663 = vunpack.c.0.s8 %v662
          %v664 = vlaneseq
          %v665 = vshrl.u32 %v664, 7
          %v666 = vsub.s32 %v663, %v665
          %v667 = vrot.slane %v653, %v666
          %v668 = vcombine.high %v651, 0.0
          %v670 = vunpack.c.l.s4 1983009808
          %v671 = vunpack.c.0.s8 %v670
          %v672 = vlaneseq
          %v673 = vshrl.u32 %v672, 7
          %v674 = vsub.s32 %v671, %v673
          %v675 = vrot.slane %v651, %v674
          %v677 = vunpack.c.l.s4 1983009808
          %v678 = vunpack.c.0.s8 %v677
          %v679 = vlaneseq
          %v680 = vshrl.u32 %v679, 7
          %v681 = vsub.s32 %v678, %v680
          %v682 = vrot.slane %v668, %v681
          %v683 = vcombine.low %v660, %v675
          %v684 = vcombine.high %v660, %v675
          %v686 = vunpack.c.l.s4 1934713408
          %v687 = vunpack.c.0.s8 %v686
          %v688 = vlaneseq
          %v689 = vshrl.u32 %v688, 7
          %v690 = vsub.s32 %v687, %v689
          %v691 = vrot.slane %v683, %v690
          %v693 = vunpack.c.l.s4 1934713408
          %v694 = vunpack.c.0.s8 %v693
          %v695 = vlaneseq
          %v696 = vshrl.u32 %v695, 7
          %v697 = vsub.s32 %v694, %v696
          %v698 = vrot.slane %v684, %v697
          %v699 = vcombine.low %v667, %v682
          %v700 = vcombine.high %v667, %v682
          %v702 = vunpack.c.l.s4 1934713408
          %v703 = vunpack.c.0.s8 %v702
          %v704 = vlaneseq
          %v705 = vshrl.u32 %v704, 7
          %v706 = vsub.s32 %v703, %v705
          %v707 = vrot.slane %v699, %v706
          %v709 = vunpack.c.l.s4 1934713408
          %v710 = vunpack.c.0.s8 %v709
          %v711 = vlaneseq
          %v712 = vshrl.u32 %v711, 7
          %v713 = vsub.s32 %v710, %v712
          %v714 = vrot.slane %v700, %v713
          %v715 = vcombine.high %v691, 0.0
          %v716 = vcombine.high %v698, 0.0
          %v717 = vcombine.high %v707, 0.0
          %v718 = vcombine.high %v714, 0.0
          %v719 = vcombine.low %v691, %v698
          %v721 = vunpack.c.l.s4 1983009808
          %v722 = vunpack.c.0.s8 %v721
          %v723 = vlaneseq
          %v724 = vshrl.u32 %v723, 7
          %v725 = vsub.s32 %v722, %v724
          %v726 = vrot.slane %v719, %v725
          %v727 = vcombine.low %v715, %v716
          %v729 = vunpack.c.l.s4 1983009808
          %v730 = vunpack.c.0.s8 %v729
          %v731 = vlaneseq
          %v732 = vshrl.u32 %v731, 7
          %v733 = vsub.s32 %v730, %v732
          %v734 = vrot.slane %v727, %v733
          %v735 = vcombine.low %v707, %v714
          %v737 = vunpack.c.l.s4 1983009808
          %v738 = vunpack.c.0.s8 %v737
          %v739 = vlaneseq
          %v740 = vshrl.u32 %v739, 7
          %v741 = vsub.s32 %v738, %v740
          %v742 = vrot.slane %v735, %v741
          %v743 = vcombine.low %v717, %v718
          %v745 = vunpack.c.l.s4 1983009808
          %v746 = vunpack.c.0.s8 %v745
          %v747 = vlaneseq
          %v748 = vshrl.u32 %v747, 7
          %v749 = vsub.s32 %v746, %v748
          %v750 = vrot.slane %v743, %v749
          %v751 = vcombine.low %v726, %v734
          %v753 = vunpack.c.l.s4 1934713408
          %v754 = vunpack.c.0.s8 %v753
          %v755 = vlaneseq
          %v756 = vshrl.u32 %v755, 7
          %v757 = vsub.s32 %v754, %v756
          %v758 = vrot.slane %v751, %v757
          %v759 = vcombine.low %v742, %v750
          %v761 = vunpack.c.l.s4 1934713408
          %v762 = vunpack.c.0.s8 %v761
          %v763 = vlaneseq
          %v764 = vshrl.u32 %v763, 7
          %v765 = vsub.s32 %v762, %v764
          %v766 = vrot.slane %v759, %v765
          %v767 = vcombine.low %v758, %v766
          %v768 = vcombine.high %v758, %v766
          %769 = vrot.lane.b32.xlu0 %v646, 96
          %v770 = vpop.permute.xlu0 %769
          %771 = vrot.lane.b32.xlu0 %v651, 96
          %v772 = vpop.permute.xlu0 %771
          %v775 = vcombine.high %v770, 0.0
          %v777 = vunpack.c.l.s4 1983009808
          %v778 = vunpack.c.0.s8 %v777
          %v779 = vlaneseq
          %v780 = vshrl.u32 %v779, 7
          %v781 = vsub.s32 %v778, %v780
          %v782 = vrot.slane %v770, %v781
          %v784 = vunpack.c.l.s4 1983009808
          %v785 = vunpack.c.0.s8 %v784
          %v786 = vlaneseq
          %v787 = vshrl.u32 %v786, 7
          %v788 = vsub.s32 %v785, %v787
          %v789 = vrot.slane %v775, %v788
          %v790 = vcombine.high %v772, 0.0
          %v792 = vunpack.c.l.s4 1983009808
          %v793 = vunpack.c.0.s8 %v792
          %v794 = vlaneseq
          %v795 = vshrl.u32 %v794, 7
          %v796 = vsub.s32 %v793, %v795
          %v797 = vrot.slane %v772, %v796
          %v799 = vunpack.c.l.s4 1983009808
          %v800 = vunpack.c.0.s8 %v799
          %v801 = vlaneseq
          %v802 = vshrl.u32 %v801, 7
          %v803 = vsub.s32 %v800, %v802
          %v804 = vrot.slane %v790, %v803
          %v805 = vcombine.low %v782, %v797
          %v806 = vcombine.high %v782, %v797
          %v808 = vunpack.c.l.s4 1934713408
          %v809 = vunpack.c.0.s8 %v808
          %v810 = vlaneseq
          %v811 = vshrl.u32 %v810, 7
          %v812 = vsub.s32 %v809, %v811
          %v813 = vrot.slane %v805, %v812
          %v815 = vunpack.c.l.s4 1934713408
          %v816 = vunpack.c.0.s8 %v815
          %v817 = vlaneseq
          %v818 = vshrl.u32 %v817, 7
          %v819 = vsub.s32 %v816, %v818
          %v820 = vrot.slane %v806, %v819
          %v821 = vcombine.low %v789, %v804
          %v822 = vcombine.high %v789, %v804
          %v824 = vunpack.c.l.s4 1934713408
          %v825 = vunpack.c.0.s8 %v824
          %v826 = vlaneseq
          %v827 = vshrl.u32 %v826, 7
          %v828 = vsub.s32 %v825, %v827
          %v829 = vrot.slane %v821, %v828
          %v831 = vunpack.c.l.s4 1934713408
          %v832 = vunpack.c.0.s8 %v831
          %v833 = vlaneseq
          %v834 = vshrl.u32 %v833, 7
          %v835 = vsub.s32 %v832, %v834
          %v836 = vrot.slane %v822, %v835
          %v837 = vcombine.high %v813, 0.0
          %v838 = vcombine.high %v820, 0.0
          %v839 = vcombine.high %v829, 0.0
          %v840 = vcombine.high %v836, 0.0
          %v841 = vcombine.low %v813, %v820
          %v843 = vunpack.c.l.s4 1983009808
          %v844 = vunpack.c.0.s8 %v843
          %v845 = vlaneseq
          %v846 = vshrl.u32 %v845, 7
          %v847 = vsub.s32 %v844, %v846
          %v848 = vrot.slane %v841, %v847
          %v849 = vcombine.low %v837, %v838
          %v851 = vunpack.c.l.s4 1983009808
          %v852 = vunpack.c.0.s8 %v851
          %v853 = vlaneseq
          %v854 = vshrl.u32 %v853, 7
          %v855 = vsub.s32 %v852, %v854
          %v856 = vrot.slane %v849, %v855
          %v857 = vcombine.low %v829, %v836
          %v859 = vunpack.c.l.s4 1983009808
          %v860 = vunpack.c.0.s8 %v859
          %v861 = vlaneseq
          %v862 = vshrl.u32 %v861, 7
          %v863 = vsub.s32 %v860, %v862
          %v864 = vrot.slane %v857, %v863
          %v865 = vcombine.low %v839, %v840
          %v867 = vunpack.c.l.s4 1983009808
          %v868 = vunpack.c.0.s8 %v867
          %v869 = vlaneseq
          %v870 = vshrl.u32 %v869, 7
          %v871 = vsub.s32 %v868, %v870
          %v872 = vrot.slane %v865, %v871
          %v873 = vcombine.low %v848, %v856
          %v875 = vunpack.c.l.s4 1934713408
          %v876 = vunpack.c.0.s8 %v875
          %v877 = vlaneseq
          %v878 = vshrl.u32 %v877, 7
          %v879 = vsub.s32 %v876, %v878
          %v880 = vrot.slane %v873, %v879
          %v881 = vcombine.low %v864, %v872
          %v883 = vunpack.c.l.s4 1934713408
          %v884 = vunpack.c.0.s8 %v883
          %v885 = vlaneseq
          %v886 = vshrl.u32 %v885, 7
          %v887 = vsub.s32 %v884, %v886
          %v888 = vrot.slane %v881, %v887
          %v889 = vcombine.low %v880, %v888
          %v890 = vcombine.high %v880, %v888
          %vm891 = vcmask 130048
          %892 = vst.msk [vmem:[#allocation2] sm:$0xff] %vm891, %v767
          %893 = vst.msk [vmem:[#allocation2 + $0x8] sm:$0xff] %vm891, %v768
          %896 = vrot.lane.b32.xlu0 %v889, 16
          %v897 = vpop.permute.xlu0 %896
          %898 = vrot.lane.b32.xlu0 %v890, 16
          %v899 = vpop.permute.xlu0 %898
          %vm902 = vcmask 261248
          %903 = vst.msk [vmem:[#allocation2] sm:$0xff] %vm902, %v897
          %904 = vst.msk [vmem:[#allocation2 + $0x8] sm:$0xff] %vm902, %v899
        $region88: #{tpu_custom_call.1} parent=83 // pred_fallthru
          _
        %s905 = smul.u32 %s35, 8
        %s906 = scalar_lea.vmem %s551, %s905
        %v907 = vld [vmem:[%s906] sm:$0xff]
        %v908 = vld [vmem:[%s558] sm:$0xf]
        %v909 = vunpack.c.l.bf16 %v908
        %v910 = vld [vmem:[%s3] sm:$0x1]
        %v911 = vld [vmem:[%s7] sm:$0x1]
        %v912 = vld [vmem:[%s8] sm:$0x1]
        %v913 = vld [vmem:[%s9] sm:$0x1]
        %v914 = vld [vmem:[%s11] sm:$0x1]
        %v915 = vld [vmem:[%s13] sm:$0x1]
        %v916 = vld [vmem:[%s14] sm:$0x1]
        %v917 = vld [vmem:[%s15] sm:$0x1]
        %v918 = vld [vmem:[%s2] sm:$0xff]
        %v919 = vld [vmem:[%s2 + $0x8] sm:$0xff]
        %v920 = vld [vmem:[%s2 + $0x10] sm:$0xff]
        %v921 = vld [vmem:[%s2 + $0x18] sm:$0xff]
        %v923 = vlaneseq
        %v924 = vshrl.u32 %v923, 7
        %v925 = vsub.s32 0, %v924
        %v926 = vrot.slane %v910, %v925
        %vm928 = vcmask 261120
        %v930 = vsel %vm928, %v907, 0
        %932 = vmatprep.subr.mxu0 0.0
        %933 = vmatpush1.msra.mxu0 %v918
        %934 = vmatprep.subr.mxu0 0.0
        %935 = vmatpush1.msra.mxu0 %v919
        %936 = vmatprep.subr.mxu0 0.0
        %937 = vmatpush1.msra.mxu0 %v920
        %938 = vmatprep.subr.mxu0 0.0
        %939 = vmatpush1.msra.mxu0 %v921
        %940 = vmatprep.subr.mxu0 0.0
        %941 = vmatpush1.msra.mxu0 0.0
        %942 = vmatprep.subr.mxu0 0.0
        %943 = vmatpush1.msra.mxu0 0.0
        %944 = vmatprep.subr.mxu0 0.0
        %945 = vmatpush1.msra.mxu0 0.0
        %946 = vmatprep.subr.mxu0 0.0
        %947 = vmatpush1.msra.mxu0 0.0
        %948 = vmatprep.subr.mxu0 0.0
        %949 = vmatpush1.msra.mxu0 0.0
        %950 = vmatprep.subr.mxu0 0.0
        %951 = vmatpush1.msra.mxu0 0.0
        %952 = vmatprep.subr.mxu0 0.0
        %953 = vmatpush1.msra.mxu0 0.0
        %954 = vmatprep.subr.mxu0 0.0
        %955 = vmatpush1.msra.mxu0 0.0
        %956 = vmatprep.subr.mxu0 0.0
        %957 = vmatpush1.msra.mxu0 0.0
        %958 = vmatprep.subr.mxu0 0.0
        %959 = vmatpush1.msra.mxu0 0.0
        %960 = vmatprep.subr.mxu0 0.0
        %961 = vmatpush1.msra.mxu0 0.0
        %962 = vmatprep.subr.mxu0 0.0
        %963 = vmatpush1.msra.mxu0 0.0
        %964 = vmatprep.subr.mxu0 0.0
        %965 = vmatpush1.msra.mxu0 0.0
        %966 = vmatprep.subr.mxu0 0.0
        %967 = vmatpush1.msra.mxu0 0.0
        %968 = vmatprep.subr.mxu0 0.0
        %969 = vmatpush1.msra.mxu0 0.0
        %970 = vmatprep.subr.mxu0 0.0
        %971 = vmatpush1.msra.mxu0 0.0
        %972 = vmatprep.subr.mxu0 0.0
        %973 = vmatpush1.msra.mxu0 0.0
        %974 = vmatprep.subr.mxu0 0.0
        %975 = vmatpush1.msra.mxu0 0.0
        %976 = vmatprep.subr.mxu0 0.0
        %977 = vmatpush1.msra.mxu0 0.0
        %978 = vmatprep.subr.mxu0 0.0
        %979 = vmatpush1.msra.mxu0 0.0
        %980 = vmatprep.subr.mxu0 0.0
        %981 = vmatpush1.msra.mxu0 0.0
        %982 = vmatprep.subr.mxu0 0.0
        %983 = vmatpush1.msra.mxu0 0.0
        %984 = vmatprep.subr.mxu0 0.0
        %985 = vmatpush1.msra.mxu0 0.0
        %986 = vmatprep.subr.mxu0 0.0
        %987 = vmatpush1.msra.mxu0 0.0
        %988 = vmatprep.subr.mxu0 0.0
        %989 = vmatpush1.msra.mxu0 0.0
        %990 = vmatprep.subr.mxu0 0.0
        %991 = vmatpush1.msra.mxu0 0.0
        %992 = vmatprep.subr.mxu0 0.0
        %993 = vmatpush1.msra.mxu0 0.0
        %994 = vmatprep.subr.mxu0 0.0
        %995 = vmatpush1.msra.mxu0 0.0
        %996 = vmatprep.mubr.f32.mxu0 0.0
        %997 = vmatmul.mubr.f32.gmra.mrb[0].mxu0 %v930
        %v998 = vpop.f32.mrb[0].mxu0
        %v999 = vadd.f32 %v926, %v998
        %v1000 = vpop.f32.mrb[0].mxu0
        %1001 = vdwg.mxu0
        %1003 = vrot.lane.b32.xlu0 %v999, 112
        %v1004 = vpop.permute.xlu0 %1003
        %v1006 = vcombine.high %v999, 0.0
        %v1008 = vunpack.c.l.s4 1983009808
        %v1009 = vunpack.c.0.s8 %v1008
        %v1010 = vlaneseq
        %v1011 = vshrl.u32 %v1010, 7
        %v1012 = vsub.s32 %v1009, %v1011
        %v1013 = vrot.slane %v999, %v1012
        %v1015 = vunpack.c.l.s4 1983009808
        %v1016 = vunpack.c.0.s8 %v1015
        %v1017 = vlaneseq
        %v1018 = vshrl.u32 %v1017, 7
        %v1019 = vsub.s32 %v1016, %v1018
        %v1020 = vrot.slane %v1006, %v1019
        %v1021 = vcombine.high %v1004, 0.0
        %v1023 = vunpack.c.l.s4 1983009808
        %v1024 = vunpack.c.0.s8 %v1023
        %v1025 = vlaneseq
        %v1026 = vshrl.u32 %v1025, 7
        %v1027 = vsub.s32 %v1024, %v1026
        %v1028 = vrot.slane %v1004, %v1027
        %v1030 = vunpack.c.l.s4 1983009808
        %v1031 = vunpack.c.0.s8 %v1030
        %v1032 = vlaneseq
        %v1033 = vshrl.u32 %v1032, 7
        %v1034 = vsub.s32 %v1031, %v1033
        %v1035 = vrot.slane %v1021, %v1034
        %v1036 = vcombine.low %v1013, %v1028
        %v1037 = vcombine.high %v1013, %v1028
        %v1039 = vunpack.c.l.s4 1934713408
        %v1040 = vunpack.c.0.s8 %v1039
        %v1041 = vlaneseq
        %v1042 = vshrl.u32 %v1041, 7
        %v1043 = vsub.s32 %v1040, %v1042
        %v1044 = vrot.slane %v1036, %v1043
        %v1046 = vunpack.c.l.s4 1934713408
        %v1047 = vunpack.c.0.s8 %v1046
        %v1048 = vlaneseq
        %v1049 = vshrl.u32 %v1048, 7
        %v1050 = vsub.s32 %v1047, %v1049
        %v1051 = vrot.slane %v1037, %v1050
        %v1052 = vcombine.low %v1020, %v1035
        %v1053 = vcombine.high %v1020, %v1035
        %v1055 = vunpack.c.l.s4 1934713408
        %v1056 = vunpack.c.0.s8 %v1055
        %v1057 = vlaneseq
        %v1058 = vshrl.u32 %v1057, 7
        %v1059 = vsub.s32 %v1056, %v1058
        %v1060 = vrot.slane %v1052, %v1059
        %v1062 = vunpack.c.l.s4 1934713408
        %v1063 = vunpack.c.0.s8 %v1062
        %v1064 = vlaneseq
        %v1065 = vshrl.u32 %v1064, 7
        %v1066 = vsub.s32 %v1063, %v1065
        %v1067 = vrot.slane %v1053, %v1066
        %v1068 = vcombine.high %v1044, 0.0
        %v1069 = vcombine.high %v1051, 0.0
        %v1070 = vcombine.high %v1060, 0.0
        %v1071 = vcombine.high %v1067, 0.0
        %v1072 = vcombine.low %v1044, %v1051
        %v1074 = vunpack.c.l.s4 1983009808
        %v1075 = vunpack.c.0.s8 %v1074
        %v1076 = vlaneseq
        %v1077 = vshrl.u32 %v1076, 7
        %v1078 = vsub.s32 %v1075, %v1077
        %v1079 = vrot.slane %v1072, %v1078
        %v1080 = vcombine.low %v1068, %v1069
        %v1082 = vunpack.c.l.s4 1983009808
        %v1083 = vunpack.c.0.s8 %v1082
        %v1084 = vlaneseq
        %v1085 = vshrl.u32 %v1084, 7
        %v1086 = vsub.s32 %v1083, %v1085
        %v1087 = vrot.slane %v1080, %v1086
        %v1088 = vcombine.low %v1060, %v1067
        %v1090 = vunpack.c.l.s4 1983009808
        %v1091 = vunpack.c.0.s8 %v1090
        %v1092 = vlaneseq
        %v1093 = vshrl.u32 %v1092, 7
        %v1094 = vsub.s32 %v1091, %v1093
        %v1095 = vrot.slane %v1088, %v1094
        %v1096 = vcombine.low %v1070, %v1071
        %v1098 = vunpack.c.l.s4 1983009808
        %v1099 = vunpack.c.0.s8 %v1098
        %v1100 = vlaneseq
        %v1101 = vshrl.u32 %v1100, 7
        %v1102 = vsub.s32 %v1099, %v1101
        %v1103 = vrot.slane %v1096, %v1102
        %v1104 = vcombine.low %v1079, %v1087
        %v1106 = vunpack.c.l.s4 1934713408
        %v1107 = vunpack.c.0.s8 %v1106
        %v1108 = vlaneseq
        %v1109 = vshrl.u32 %v1108, 7
        %v1110 = vsub.s32 %v1107, %v1109
        %v1111 = vrot.slane %v1104, %v1110
        %v1112 = vcombine.low %v1095, %v1103
        %v1114 = vunpack.c.l.s4 1934713408
        %v1115 = vunpack.c.0.s8 %v1114
        %v1116 = vlaneseq
        %v1117 = vshrl.u32 %v1116, 7
        %v1118 = vsub.s32 %v1115, %v1117
        %v1119 = vrot.slane %v1112, %v1118
        %v1120 = vcombine.low %v1111, %v1119
        %v1121 = vcombine.high %v1111, %v1119
        %v1122 = vld [vmem:[#allocation2] sm:$0xff]
        %v1123 = vld [vmem:[#allocation2 + $0x8] sm:$0xff]
        %vm1124 = vcmask 130048
        %v1126 = vsel %vm1124, %v1120, 0
        %v1129 = vsel %vm1124, %v1122, 0
        %1131 = vmatprep.subr.mxu0 0.0
        %1132 = vmatpush1.xpose.msra.mxu0 %v1129
        %1133 = vmatprep.subr.mxu0 0.0
        %1134 = vmatpush1.xpose.msra.mxu0 0.0
        %1135 = vmatprep.subr.mxu0 0.0
        %1136 = vmatpush1.xpose.msra.mxu0 0.0
        %1137 = vmatprep.subr.mxu0 0.0
        %1138 = vmatpush1.xpose.msra.mxu0 0.0
        %1139 = vmatprep.subr.mxu0 0.0
        %1140 = vmatpush1.xpose.msra.mxu0 0.0
        %1141 = vmatprep.subr.mxu0 0.0
        %1142 = vmatpush1.xpose.msra.mxu0 0.0
        %1143 = vmatprep.subr.mxu0 0.0
        %1144 = vmatpush1.xpose.msra.mxu0 0.0
        %1145 = vmatprep.subr.mxu0 0.0
        %1146 = vmatpush1.xpose.msra.mxu0 0.0
        %1147 = vmatprep.subr.mxu0 0.0
        %1148 = vmatpush1.xpose.msra.mxu0 0.0
        %1149 = vmatprep.subr.mxu0 0.0
        %1150 = vmatpush1.xpose.msra.mxu0 0.0
        %1151 = vmatprep.subr.mxu0 0.0
        %1152 = vmatpush1.xpose.msra.mxu0 0.0
        %1153 = vmatprep.subr.mxu0 0.0
        %1154 = vmatpush1.xpose.msra.mxu0 0.0
        %1155 = vmatprep.subr.mxu0 0.0
        %1156 = vmatpush1.xpose.msra.mxu0 0.0
        %1157 = vmatprep.subr.mxu0 0.0
        %1158 = vmatpush1.xpose.msra.mxu0 0.0
        %1159 = vmatprep.subr.mxu0 0.0
        %1160 = vmatpush1.xpose.msra.mxu0 0.0
        %1161 = vmatprep.subr.mxu0 0.0
        %1162 = vmatpush1.xpose.msra.mxu0 0.0
        %1163 = vmatprep.subr.mxu0 0.0
        %1164 = vmatpush1.xpose.msra.mxu0 0.0
        %1165 = vmatprep.subr.mxu0 0.0
        %1166 = vmatpush1.xpose.msra.mxu0 0.0
        %1167 = vmatprep.subr.mxu0 0.0
        %1168 = vmatpush1.xpose.msra.mxu0 0.0
        %1169 = vmatprep.subr.mxu0 0.0
        %1170 = vmatpush1.xpose.msra.mxu0 0.0
        %1171 = vmatprep.subr.mxu0 0.0
        %1172 = vmatpush1.xpose.msra.mxu0 0.0
        %1173 = vmatprep.subr.mxu0 0.0
        %1174 = vmatpush1.xpose.msra.mxu0 0.0
        %1175 = vmatprep.subr.mxu0 0.0
        %1176 = vmatpush1.xpose.msra.mxu0 0.0
        %1177 = vmatprep.subr.mxu0 0.0
        %1178 = vmatpush1.xpose.msra.mxu0 0.0
        %1179 = vmatprep.subr.mxu0 0.0
        %1180 = vmatpush1.xpose.msra.mxu0 0.0
        %1181 = vmatprep.subr.mxu0 0.0
        %1182 = vmatpush1.xpose.msra.mxu0 0.0
        %1183 = vmatprep.subr.mxu0 0.0
        %1184 = vmatpush1.xpose.msra.mxu0 0.0
        %1185 = vmatprep.subr.mxu0 0.0
        %1186 = vmatpush1.xpose.msra.mxu0 0.0
        %1187 = vmatprep.subr.mxu0 0.0
        %1188 = vmatpush1.xpose.msra.mxu0 0.0
        %1189 = vmatprep.subr.mxu0 0.0
        %1190 = vmatpush1.xpose.msra.mxu0 0.0
        %1191 = vmatprep.subr.mxu0 0.0
        %1192 = vmatpush1.xpose.msra.mxu0 0.0
        %1193 = vmatprep.subr.mxu0 0.0
        %1194 = vmatpush1.xpose.msra.mxu0 0.0
        %1195 = vmatprep.mubr.f32.mxu0 0.0
        %1196 = vmatmul.mubr.f32.gmra.mrb[0].mxu0 %v1126
        %v1197 = vpop.f32.mrb[0].mxu0
        %v1198 = vadd.f32 0.0, %v1197
        %v1199 = vpop.f32.mrb[0].mxu0
        %1200 = vdwg.mxu0
        %v1202 = vsel %vm1124, %v1121, 0
        %v1205 = vsel %vm1124, %v1123, 0
        %1207 = vmatprep.subr.mxu0 0.0
        %1208 = vmatpush1.xpose.msra.mxu0 %v1205
        %1209 = vmatprep.subr.mxu0 0.0
        %1210 = vmatpush1.xpose.msra.mxu0 0.0
        %1211 = vmatprep.subr.mxu0 0.0
        %1212 = vmatpush1.xpose.msra.mxu0 0.0
        %1213 = vmatprep.subr.mxu0 0.0
        %1214 = vmatpush1.xpose.msra.mxu0 0.0
        %1215 = vmatprep.subr.mxu0 0.0
        %1216 = vmatpush1.xpose.msra.mxu0 0.0
        %1217 = vmatprep.subr.mxu0 0.0
        %1218 = vmatpush1.xpose.msra.mxu0 0.0
        %1219 = vmatprep.subr.mxu0 0.0
        %1220 = vmatpush1.xpose.msra.mxu0 0.0
        %1221 = vmatprep.subr.mxu0 0.0
        %1222 = vmatpush1.xpose.msra.mxu0 0.0
        %1223 = vmatprep.subr.mxu0 0.0
        %1224 = vmatpush1.xpose.msra.mxu0 0.0
        %1225 = vmatprep.subr.mxu0 0.0
        %1226 = vmatpush1.xpose.msra.mxu0 0.0
        %1227 = vmatprep.subr.mxu0 0.0
        %1228 = vmatpush1.xpose.msra.mxu0 0.0
        %1229 = vmatprep.subr.mxu0 0.0
        %1230 = vmatpush1.xpose.msra.mxu0 0.0
        %1231 = vmatprep.subr.mxu0 0.0
        %1232 = vmatpush1.xpose.msra.mxu0 0.0
        %1233 = vmatprep.subr.mxu0 0.0
        %1234 = vmatpush1.xpose.msra.mxu0 0.0
        %1235 = vmatprep.subr.mxu0 0.0
        %1236 = vmatpush1.xpose.msra.mxu0 0.0
        %1237 = vmatprep.subr.mxu0 0.0
        %1238 = vmatpush1.xpose.msra.mxu0 0.0
        %1239 = vmatprep.subr.mxu0 0.0
        %1240 = vmatpush1.xpose.msra.mxu0 0.0
        %1241 = vmatprep.subr.mxu0 0.0
        %1242 = vmatpush1.xpose.msra.mxu0 0.0
        %1243 = vmatprep.subr.mxu0 0.0
        %1244 = vmatpush1.xpose.msra.mxu0 0.0
        %1245 = vmatprep.subr.mxu0 0.0
        %1246 = vmatpush1.xpose.msra.mxu0 0.0
        %1247 = vmatprep.subr.mxu0 0.0
        %1248 = vmatpush1.xpose.msra.mxu0 0.0
        %1249 = vmatprep.subr.mxu0 0.0
        %1250 = vmatpush1.xpose.msra.mxu0 0.0
        %1251 = vmatprep.subr.mxu0 0.0
        %1252 = vmatpush1.xpose.msra.mxu0 0.0
        %1253 = vmatprep.subr.mxu0 0.0
        %1254 = vmatpush1.xpose.msra.mxu0 0.0
        %1255 = vmatprep.subr.mxu0 0.0
        %1256 = vmatpush1.xpose.msra.mxu0 0.0
        %1257 = vmatprep.subr.mxu0 0.0
        %1258 = vmatpush1.xpose.msra.mxu0 0.0
        %1259 = vmatprep.subr.mxu0 0.0
        %1260 = vmatpush1.xpose.msra.mxu0 0.0
        %1261 = vmatprep.subr.mxu0 0.0
        %1262 = vmatpush1.xpose.msra.mxu0 0.0
        %1263 = vmatprep.subr.mxu0 0.0
        %1264 = vmatpush1.xpose.msra.mxu0 0.0
        %1265 = vmatprep.subr.mxu0 0.0
        %1266 = vmatpush1.xpose.msra.mxu0 0.0
        %1267 = vmatprep.subr.mxu0 0.0
        %1268 = vmatpush1.xpose.msra.mxu0 0.0
        %1269 = vmatprep.subr.mxu0 0.0
        %1270 = vmatpush1.xpose.msra.mxu0 0.0
        %1271 = vmatprep.mubr.f32.mxu0 0.0
        %1272 = vmatmul.mubr.f32.gmra.mrb[0].mxu0 %v1202
        %v1273 = vpop.f32.mrb[0].mxu0
        %v1274 = vadd.f32 0.0, %v1273
        %v1275 = vpop.f32.mrb[0].mxu0
        %1276 = vdwg.mxu0
        %v1277 = vmul.f32 %v1198, 0.25
        %v1278 = vmul.f32 %v1274, 0.25
        %v1279 = vadd.f32 %v1277, %v909
        %v1280 = vadd.f32 %v1278, %v909
        %vm1281 = vcmask 64512
        %v1282 = vsel %vm1281, %v1279, -inf
        %1283 = vmax.xlane.f32.xlu0 %v1282
        %v1284 = vpop.xlane.xlu0 %1283
        %v1285 = vsel %vm1281, %v1280, -inf
        %1286 = vmax.xlane.f32.xlu0 %v1285
        %v1287 = vpop.xlane.xlu0 %1286
        %v1288 = vsub.f32 %v1279, %v1284
        %v1289 = vsub.f32 %v1280, %v1287
        %v1290 = vmul.f32 %v1288, 1.442695
        %v1291 = vpow.pop %v1290
        %v1292 = vmul.f32 %v1289, 1.442695
        %v1293 = vpow.pop %v1292
        %v1294 = vsel %vm1281, %v1291, 0.0
        %1295 = vadd.xlane.f32.xlu0 %v1294
        %v1296 = vpop.xlane.xlu0 %1295
        %v1297 = vsel %vm1281, %v1293, 0.0
        %1298 = vadd.xlane.f32.xlu0 %v1297
        %v1299 = vpop.xlane.xlu0 %1298
        %v1300 = vrcp.pop %v1296
        %v1301 = vmul.f32 1.0, %v1300
        %v1302 = vrcp.pop %v1299
        %v1303 = vmul.f32 1.0, %v1302
        %v1304 = vmul.f32 %v1291, %v1301
        %v1305 = vmul.f32 %v1293, %v1303
        %1306 = vrot.lane.b32.xlu0 %v1122, 112
        %v1307 = vpop.permute.xlu0 %1306
        %v1310 = vsel %vm1281, %v1304, 0
        %1312 = vmatprep.subr.mxu0 0.0
        %1313 = vmatpush1.msra.mxu0 %v1307
        %1314 = vmatprep.subr.mxu0 0.0
        %1315 = vmatpush1.msra.mxu0 0.0
        %1316 = vmatprep.subr.mxu0 0.0
        %1317 = vmatpush1.msra.mxu0 0.0
        %1318 = vmatprep.subr.mxu0 0.0
        %1319 = vmatpush1.msra.mxu0 0.0
        %1320 = vmatprep.subr.mxu0 0.0
        %1321 = vmatpush1.msra.mxu0 0.0
        %1322 = vmatprep.subr.mxu0 0.0
        %1323 = vmatpush1.msra.mxu0 0.0
        %1324 = vmatprep.subr.mxu0 0.0
        %1325 = vmatpush1.msra.mxu0 0.0
        %1326 = vmatprep.subr.mxu0 0.0
        %1327 = vmatpush1.msra.mxu0 0.0
        %1328 = vmatprep.subr.mxu0 0.0
        %1329 = vmatpush1.msra.mxu0 0.0
        %1330 = vmatprep.subr.mxu0 0.0
        %1331 = vmatpush1.msra.mxu0 0.0
        %1332 = vmatprep.subr.mxu0 0.0
        %1333 = vmatpush1.msra.mxu0 0.0
        %1334 = vmatprep.subr.mxu0 0.0
        %1335 = vmatpush1.msra.mxu0 0.0
        %1336 = vmatprep.subr.mxu0 0.0
        %1337 = vmatpush1.msra.mxu0 0.0
        %1338 = vmatprep.subr.mxu0 0.0
        %1339 = vmatpush1.msra.mxu0 0.0
        %1340 = vmatprep.subr.mxu0 0.0
        %1341 = vmatpush1.msra.mxu0 0.0
        %1342 = vmatprep.subr.mxu0 0.0
        %1343 = vmatpush1.msra.mxu0 0.0
        %1344 = vmatprep.subr.mxu0 0.0
        %1345 = vmatpush1.msra.mxu0 0.0
        %1346 = vmatprep.subr.mxu0 0.0
        %1347 = vmatpush1.msra.mxu0 0.0
        %1348 = vmatprep.subr.mxu0 0.0
        %1349 = vmatpush1.msra.mxu0 0.0
        %1350 = vmatprep.subr.mxu0 0.0
        %1351 = vmatpush1.msra.mxu0 0.0
        %1352 = vmatprep.subr.mxu0 0.0
        %1353 = vmatpush1.msra.mxu0 0.0
        %1354 = vmatprep.subr.mxu0 0.0
        %1355 = vmatpush1.msra.mxu0 0.0
        %1356 = vmatprep.subr.mxu0 0.0
        %1357 = vmatpush1.msra.mxu0 0.0
        %1358 = vmatprep.subr.mxu0 0.0
        %1359 = vmatpush1.msra.mxu0 0.0
        %1360 = vmatprep.subr.mxu0 0.0
        %1361 = vmatpush1.msra.mxu0 0.0
        %1362 = vmatprep.subr.mxu0 0.0
        %1363 = vmatpush1.msra.mxu0 0.0
        %1364 = vmatprep.subr.mxu0 0.0
        %1365 = vmatpush1.msra.mxu0 0.0
        %1366 = vmatprep.subr.mxu0 0.0
        %1367 = vmatpush1.msra.mxu0 0.0
        %1368 = vmatprep.subr.mxu0 0.0
        %1369 = vmatpush1.msra.mxu0 0.0
        %1370 = vmatprep.subr.mxu0 0.0
        %1371 = vmatpush1.msra.mxu0 0.0
        %1372 = vmatprep.subr.mxu0 0.0
        %1373 = vmatpush1.msra.mxu0 0.0
        %1374 = vmatprep.subr.mxu0 0.0
        %1375 = vmatpush1.msra.mxu0 0.0
        %1376 = vmatprep.mubr.f32.mxu0 0.0
        %1377 = vmatmul.mubr.f32.gmra.mrb[0].mxu0 %v1310
        %v1378 = vpop.f32.mrb[0].mxu0
        %v1379 = vadd.f32 0.0, %v1378
        %v1380 = vpop.f32.mrb[0].mxu0
        %1381 = vdwg.mxu0
        %1382 = vrot.lane.b32.xlu0 %v1123, 112
        %v1383 = vpop.permute.xlu0 %1382
        %v1386 = vsel %vm1281, %v1305, 0
        %1388 = vmatprep.subr.mxu0 0.0
        %1389 = vmatpush1.msra.mxu0 %v1383
        %1390 = vmatprep.subr.mxu0 0.0
        %1391 = vmatpush1.msra.mxu0 0.0
        %1392 = vmatprep.subr.mxu0 0.0
        %1393 = vmatpush1.msra.mxu0 0.0
        %1394 = vmatprep.subr.mxu0 0.0
        %1395 = vmatpush1.msra.mxu0 0.0
        %1396 = vmatprep.subr.mxu0 0.0
        %1397 = vmatpush1.msra.mxu0 0.0
        %1398 = vmatprep.subr.mxu0 0.0
        %1399 = vmatpush1.msra.mxu0 0.0
        %1400 = vmatprep.subr.mxu0 0.0
        %1401 = vmatpush1.msra.mxu0 0.0
        %1402 = vmatprep.subr.mxu0 0.0
        %1403 = vmatpush1.msra.mxu0 0.0
        %1404 = vmatprep.subr.mxu0 0.0
        %1405 = vmatpush1.msra.mxu0 0.0
        %1406 = vmatprep.subr.mxu0 0.0
        %1407 = vmatpush1.msra.mxu0 0.0
        %1408 = vmatprep.subr.mxu0 0.0
        %1409 = vmatpush1.msra.mxu0 0.0
        %1410 = vmatprep.subr.mxu0 0.0
        %1411 = vmatpush1.msra.mxu0 0.0
        %1412 = vmatprep.subr.mxu0 0.0
        %1413 = vmatpush1.msra.mxu0 0.0
        %1414 = vmatprep.subr.mxu0 0.0
        %1415 = vmatpush1.msra.mxu0 0.0
        %1416 = vmatprep.subr.mxu0 0.0
        %1417 = vmatpush1.msra.mxu0 0.0
        %1418 = vmatprep.subr.mxu0 0.0
        %1419 = vmatpush1.msra.mxu0 0.0
        %1420 = vmatprep.subr.mxu0 0.0
        %1421 = vmatpush1.msra.mxu0 0.0
        %1422 = vmatprep.subr.mxu0 0.0
        %1423 = vmatpush1.msra.mxu0 0.0
        %1424 = vmatprep.subr.mxu0 0.0
        %1425 = vmatpush1.msra.mxu0 0.0
        %1426 = vmatprep.subr.mxu0 0.0
        %1427 = vmatpush1.msra.mxu0 0.0
        %1428 = vmatprep.subr.mxu0 0.0
        %1429 = vmatpush1.msra.mxu0 0.0
        %1430 = vmatprep.subr.mxu0 0.0
        %1431 = vmatpush1.msra.mxu0 0.0
        %1432 = vmatprep.subr.mxu0 0.0
        %1433 = vmatpush1.msra.mxu0 0.0
        %1434 = vmatprep.subr.mxu0 0.0
        %1435 = vmatpush1.msra.mxu0 0.0
        %1436 = vmatprep.subr.mxu0 0.0
        %1437 = vmatpush1.msra.mxu0 0.0
        %1438 = vmatprep.subr.mxu0 0.0
        %1439 = vmatpush1.msra.mxu0 0.0
        %1440 = vmatprep.subr.mxu0 0.0
        %1441 = vmatpush1.msra.mxu0 0.0
        %1442 = vmatprep.subr.mxu0 0.0
        %1443 = vmatpush1.msra.mxu0 0.0
        %1444 = vmatprep.subr.mxu0 0.0
        %1445 = vmatpush1.msra.mxu0 0.0
        %1446 = vmatprep.subr.mxu0 0.0
        %1447 = vmatpush1.msra.mxu0 0.0
        %1448 = vmatprep.subr.mxu0 0.0
        %1449 = vmatpush1.msra.mxu0 0.0
        %1450 = vmatprep.subr.mxu0 0.0
        %1451 = vmatpush1.msra.mxu0 0.0
        %1452 = vmatprep.mubr.f32.mxu0 0.0
        %1453 = vmatmul.mubr.f32.gmra.mrb[0].mxu0 %v1386
        %v1454 = vpop.f32.mrb[0].mxu0
        %v1455 = vadd.f32 0.0, %v1454
        %v1456 = vpop.f32.mrb[0].mxu0
        %1457 = vdwg.mxu0
        %v1458 = vcombine.high %v1379, 0.0
        %v1460 = vunpack.c.l.s4 1983009808
        %v1461 = vunpack.c.0.s8 %v1460
        %v1462 = vlaneseq
        %v1463 = vshrl.u32 %v1462, 7
        %v1464 = vsub.s32 %v1461, %v1463
        %v1465 = vrot.slane %v1379, %v1464
        %v1467 = vunpack.c.l.s4 1983009808
        %v1468 = vunpack.c.0.s8 %v1467
        %v1469 = vlaneseq
        %v1470 = vshrl.u32 %v1469, 7
        %v1471 = vsub.s32 %v1468, %v1470
        %v1472 = vrot.slane %v1458, %v1471
        %v1473 = vcombine.high %v1455, 0.0
        %v1475 = vunpack.c.l.s4 1983009808
        %v1476 = vunpack.c.0.s8 %v1475
        %v1477 = vlaneseq
        %v1478 = vshrl.u32 %v1477, 7
        %v1479 = vsub.s32 %v1476, %v1478
        %v1480 = vrot.slane %v1455, %v1479
        %v1482 = vunpack.c.l.s4 1983009808
        %v1483 = vunpack.c.0.s8 %v1482
        %v1484 = vlaneseq
        %v1485 = vshrl.u32 %v1484, 7
        %v1486 = vsub.s32 %v1483, %v1485
        %v1487 = vrot.slane %v1473, %v1486
        %v1488 = vcombine.low %v1465, %v1480
        %v1489 = vcombine.high %v1465, %v1480
        %v1491 = vunpack.c.l.s4 1934713408
        %v1492 = vunpack.c.0.s8 %v1491
        %v1493 = vlaneseq
        %v1494 = vshrl.u32 %v1493, 7
        %v1495 = vsub.s32 %v1492, %v1494
        %v1496 = vrot.slane %v1488, %v1495
        %v1498 = vunpack.c.l.s4 1934713408
        %v1499 = vunpack.c.0.s8 %v1498
        %v1500 = vlaneseq
        %v1501 = vshrl.u32 %v1500, 7
        %v1502 = vsub.s32 %v1499, %v1501
        %v1503 = vrot.slane %v1489, %v1502
        %v1504 = vcombine.low %v1472, %v1487
        %v1505 = vcombine.high %v1472, %v1487
        %v1507 = vunpack.c.l.s4 1934713408
        %v1508 = vunpack.c.0.s8 %v1507
        %v1509 = vlaneseq
        %v1510 = vshrl.u32 %v1509, 7
        %v1511 = vsub.s32 %v1508, %v1510
        %v1512 = vrot.slane %v1504, %v1511
        %v1514 = vunpack.c.l.s4 1934713408
        %v1515 = vunpack.c.0.s8 %v1514
        %v1516 = vlaneseq
        %v1517 = vshrl.u32 %v1516, 7
        %v1518 = vsub.s32 %v1515, %v1517
        %v1519 = vrot.slane %v1505, %v1518
        %v1520 = vcombine.high %v1496, 0.0
        %v1521 = vcombine.high %v1503, 0.0
        %v1522 = vcombine.high %v1512, 0.0
        %v1523 = vcombine.high %v1519, 0.0
        %v1524 = vcombine.low %v1496, %v1503
        %v1526 = vunpack.c.l.s4 1983009808
        %v1527 = vunpack.c.0.s8 %v1526
        %v1528 = vlaneseq
        %v1529 = vshrl.u32 %v1528, 7
        %v1530 = vsub.s32 %v1527, %v1529
        %v1531 = vrot.slane %v1524, %v1530
        %v1532 = vcombine.low %v1520, %v1521
        %v1534 = vunpack.c.l.s4 1983009808
        %v1535 = vunpack.c.0.s8 %v1534
        %v1536 = vlaneseq
        %v1537 = vshrl.u32 %v1536, 7
        %v1538 = vsub.s32 %v1535, %v1537
        %v1539 = vrot.slane %v1532, %v1538
        %v1540 = vcombine.low %v1512, %v1519
        %v1542 = vunpack.c.l.s4 1983009808
        %v1543 = vunpack.c.0.s8 %v1542
        %v1544 = vlaneseq
        %v1545 = vshrl.u32 %v1544, 7
        %v1546 = vsub.s32 %v1543, %v1545
        %v1547 = vrot.slane %v1540, %v1546
        %v1548 = vcombine.low %v1522, %v1523
        %v1550 = vunpack.c.l.s4 1983009808
        %v1551 = vunpack.c.0.s8 %v1550
        %v1552 = vlaneseq
        %v1553 = vshrl.u32 %v1552, 7
        %v1554 = vsub.s32 %v1551, %v1553
        %v1555 = vrot.slane %v1548, %v1554
        %v1556 = vcombine.low %v1531, %v1539
        %v1558 = vunpack.c.l.s4 1934713408
        %v1559 = vunpack.c.0.s8 %v1558
        %v1560 = vlaneseq
        %v1561 = vshrl.u32 %v1560, 7
        %v1562 = vsub.s32 %v1559, %v1561
        %v1563 = vrot.slane %v1556, %v1562
        %v1564 = vcombine.low %v1547, %v1555
        %v1566 = vunpack.c.l.s4 1934713408
        %v1567 = vunpack.c.0.s8 %v1566
        %v1568 = vlaneseq
        %v1569 = vshrl.u32 %v1568, 7
        %v1570 = vsub.s32 %v1567, %v1569
        %v1571 = vrot.slane %v1564, %v1570
        %v1572 = vcombine.low %v1563, %v1571
        %v1573 = vcombine.high %v1563, %v1571
        %1575 = vrot.lane.b32.xlu0 %v1573, 16
        %v1576 = vpop.permute.xlu0 %1575
        %v1578 = vsel %vm1124, %v1572, %v1576
        %v1579 = vld [vmem:[%s6] sm:$0xff]
        %v1580 = vld [vmem:[%s6 + $0x8] sm:$0xff]
        %v1581 = vld [vmem:[%s6 + $0x10] sm:$0xff]
        %v1582 = vld [vmem:[%s6 + $0x18] sm:$0xff]
        %v1584 = vlaneseq
        %v1585 = vshrl.u32 %v1584, 7
        %v1586 = vsub.s32 0, %v1585
        %v1587 = vrot.slane %v911, %v1586
        %v1590 = vsel %vm928, %v1578, 0
        %1592 = vmatprep.subr.mxu0 0.0
        %1593 = vmatpush1.msra.mxu0 %v1579
        %1594 = vmatprep.subr.mxu0 0.0
        %1595 = vmatpush1.msra.mxu0 %v1580
        %1596 = vmatprep.subr.mxu0 0.0
        %1597 = vmatpush1.msra.mxu0 %v1581
        %1598 = vmatprep.subr.mxu0 0.0
        %1599 = vmatpush1.msra.mxu0 %v1582
        %1600 = vmatprep.subr.mxu0 0.0
        %1601 = vmatpush1.msra.mxu0 0.0
        %1602 = vmatprep.subr.mxu0 0.0
        %1603 = vmatpush1.msra.mxu0 0.0
        %1604 = vmatprep.subr.mxu0 0.0
        %1605 = vmatpush1.msra.mxu0 0.0
        %1606 = vmatprep.subr.mxu0 0.0
        %1607 = vmatpush1.msra.mxu0 0.0
        %1608 = vmatprep.subr.mxu0 0.0
        %1609 = vmatpush1.msra.mxu0 0.0
        %1610 = vmatprep.subr.mxu0 0.0
        %1611 = vmatpush1.msra.mxu0 0.0
        %1612 = vmatprep.subr.mxu0 0.0
        %1613 = vmatpush1.msra.mxu0 0.0
        %1614 = vmatprep.subr.mxu0 0.0
        %1615 = vmatpush1.msra.mxu0 0.0
        %1616 = vmatprep.subr.mxu0 0.0
        %1617 = vmatpush1.msra.mxu0 0.0
        %1618 = vmatprep.subr.mxu0 0.0
        %1619 = vmatpush1.msra.mxu0 0.0
        %1620 = vmatprep.subr.mxu0 0.0
        %1621 = vmatpush1.msra.mxu0 0.0
        %1622 = vmatprep.subr.mxu0 0.0
        %1623 = vmatpush1.msra.mxu0 0.0
        %1624 = vmatprep.subr.mxu0 0.0
        %1625 = vmatpush1.msra.mxu0 0.0
        %1626 = vmatprep.subr.mxu0 0.0
        %1627 = vmatpush1.msra.mxu0 0.0
        %1628 = vmatprep.subr.mxu0 0.0
        %1629 = vmatpush1.msra.mxu0 0.0
        %1630 = vmatprep.subr.mxu0 0.0
        %1631 = vmatpush1.msra.mxu0 0.0
        %1632 = vmatprep.subr.mxu0 0.0
        %1633 = vmatpush1.msra.mxu0 0.0
        %1634 = vmatprep.subr.mxu0 0.0
        %1635 = vmatpush1.msra.mxu0 0.0
        %1636 = vmatprep.subr.mxu0 0.0
        %1637 = vmatpush1.msra.mxu0 0.0
        %1638 = vmatprep.subr.mxu0 0.0
        %1639 = vmatpush1.msra.mxu0 0.0
        %1640 = vmatprep.subr.mxu0 0.0
        %1641 = vmatpush1.msra.mxu0 0.0
        %1642 = vmatprep.subr.mxu0 0.0
        %1643 = vmatpush1.msra.mxu0 0.0
        %1644 = vmatprep.subr.mxu0 0.0
        %1645 = vmatpush1.msra.mxu0 0.0
        %1646 = vmatprep.subr.mxu0 0.0
        %1647 = vmatpush1.msra.mxu0 0.0
        %1648 = vmatprep.subr.mxu0 0.0
        %1649 = vmatpush1.msra.mxu0 0.0
        %1650 = vmatprep.subr.mxu0 0.0
        %1651 = vmatpush1.msra.mxu0 0.0
        %1652 = vmatprep.subr.mxu0 0.0
        %1653 = vmatpush1.msra.mxu0 0.0
        %1654 = vmatprep.subr.mxu0 0.0
        %1655 = vmatpush1.msra.mxu0 0.0
        %1656 = vmatprep.mubr.f32.mxu0 0.0
        %1657 = vmatmul.mubr.f32.gmra.mrb[0].mxu0 %v1590
        %v1658 = vpop.f32.mrb[0].mxu0
        %v1659 = vadd.f32 %v1587, %v1658
        %v1660 = vpop.f32.mrb[0].mxu0
        %1661 = vdwg.mxu0
        %v1662 = vadd.f32 %v1659, %v907
        %v1663 = vsel %vm928, %v1662, 0.0
        %1664 = vadd.xlane.f32.xlu0 %v1663
        %v1665 = vpop.xlane.xlu0 %1664
        %v1666 = vrcp.pop 32.0
        %v1667 = vmul.f32 %v1665, %v1666
        %v1668 = vsub.f32 %v1662, %v1667
        %v1669 = vmul.f32 %v1668, %v1668
        %v1670 = vsel %vm928, %v1669, 0.0
        %1671 = vadd.xlane.f32.xlu0 %v1670
        %v1672 = vpop.xlane.xlu0 %1671
        %v1673 = vmul.f32 %v1672, %v1666
        %v1674 = vadd.f32 %v1673, 1e-12
        %v1675 = vrsqrt.pop %v1674
        %v1676 = vmul.f32 %v1668, %v1675
        %v1678 = vlaneseq
        %v1679 = vshrl.u32 %v1678, 7
        %v1680 = vsub.s32 0, %v1679
        %v1681 = vrot.slane %v912, %v1680
        %v1683 = vmul.f32 %v1681, %v1676
        %v1685 = vlaneseq
        %v1686 = vshrl.u32 %v1685, 7
        %v1687 = vsub.s32 0, %v1686
        %v1688 = vrot.slane %v913, %v1687
        %v1690 = vadd.f32 %v1683, %v1688
        %v1691 = vld [vmem:[%s10] sm:$0xff]
        %v1692 = vld [vmem:[%s10 + $0x8] sm:$0xff]
        %v1693 = vld [vmem:[%s10 + $0x10] sm:$0xff]
        %v1694 = vld [vmem:[%s10 + $0x18] sm:$0xff]
        %v1696 = vlaneseq
        %v1697 = vshrl.u32 %v1696, 7
        %v1698 = vsub.s32 0, %v1697
        %v1699 = vrot.slane %v914, %v1698
        %v1702 = vsel %vm928, %v1690, 0
        %1704 = vmatprep.subr.mxu0 0.0
        %1705 = vmatpush1.msra.mxu0 %v1691
        %1706 = vmatprep.subr.mxu0 0.0
        %1707 = vmatpush1.msra.mxu0 %v1692
        %1708 = vmatprep.subr.mxu0 0.0
        %1709 = vmatpush1.msra.mxu0 %v1693
        %1710 = vmatprep.subr.mxu0 0.0
        %1711 = vmatpush1.msra.mxu0 %v1694
        %1712 = vmatprep.subr.mxu0 0.0
        %1713 = vmatpush1.msra.mxu0 0.0
        %1714 = vmatprep.subr.mxu0 0.0
        %1715 = vmatpush1.msra.mxu0 0.0
        %1716 = vmatprep.subr.mxu0 0.0
        %1717 = vmatpush1.msra.mxu0 0.0
        %1718 = vmatprep.subr.mxu0 0.0
        %1719 = vmatpush1.msra.mxu0 0.0
        %1720 = vmatprep.subr.mxu0 0.0
        %1721 = vmatpush1.msra.mxu0 0.0
        %1722 = vmatprep.subr.mxu0 0.0
        %1723 = vmatpush1.msra.mxu0 0.0
        %1724 = vmatprep.subr.mxu0 0.0
        %1725 = vmatpush1.msra.mxu0 0.0
        %1726 = vmatprep.subr.mxu0 0.0
        %1727 = vmatpush1.msra.mxu0 0.0
        %1728 = vmatprep.subr.mxu0 0.0
        %1729 = vmatpush1.msra.mxu0 0.0
        %1730 = vmatprep.subr.mxu0 0.0
        %1731 = vmatpush1.msra.mxu0 0.0
        %1732 = vmatprep.subr.mxu0 0.0
        %1733 = vmatpush1.msra.mxu0 0.0
        %1734 = vmatprep.subr.mxu0 0.0
        %1735 = vmatpush1.msra.mxu0 0.0
        %1736 = vmatprep.subr.mxu0 0.0
        %1737 = vmatpush1.msra.mxu0 0.0
        %1738 = vmatprep.subr.mxu0 0.0
        %1739 = vmatpush1.msra.mxu0 0.0
        %1740 = vmatprep.subr.mxu0 0.0
        %1741 = vmatpush1.msra.mxu0 0.0
        %1742 = vmatprep.subr.mxu0 0.0
        %1743 = vmatpush1.msra.mxu0 0.0
        %1744 = vmatprep.subr.mxu0 0.0
        %1745 = vmatpush1.msra.mxu0 0.0
        %1746 = vmatprep.subr.mxu0 0.0
        %1747 = vmatpush1.msra.mxu0 0.0
        %1748 = vmatprep.subr.mxu0 0.0
        %1749 = vmatpush1.msra.mxu0 0.0
        %1750 = vmatprep.subr.mxu0 0.0
        %1751 = vmatpush1.msra.mxu0 0.0
        %1752 = vmatprep.subr.mxu0 0.0
        %1753 = vmatpush1.msra.mxu0 0.0
        %1754 = vmatprep.subr.mxu0 0.0
        %1755 = vmatpush1.msra.mxu0 0.0
        %1756 = vmatprep.subr.mxu0 0.0
        %1757 = vmatpush1.msra.mxu0 0.0
        %1758 = vmatprep.subr.mxu0 0.0
        %1759 = vmatpush1.msra.mxu0 0.0
        %1760 = vmatprep.subr.mxu0 0.0
        %1761 = vmatpush1.msra.mxu0 0.0
        %1762 = vmatprep.subr.mxu0 0.0
        %1763 = vmatpush1.msra.mxu0 0.0
        %1764 = vmatprep.subr.mxu0 0.0
        %1765 = vmatpush1.msra.mxu0 0.0
        %1766 = vmatprep.subr.mxu0 0.0
        %1767 = vmatpush1.msra.mxu0 0.0
        %1768 = vmatprep.mubr.f32.mxu0 0.0
        %1769 = vmatmul.mubr.f32.gmra.mrb[0].mxu0 %v1702
        %v1770 = vpop.f32.mrb[0].mxu0
        %v1771 = vadd.f32 %v1699, %v1770
        %v1772 = vpop.f32.mrb[0].mxu0
        %1773 = vdwg.mxu0
        %v1774 = vmul.f32 %v1771, 0.5
        %v1775 = vrcp.pop 1.4142135
        %v1776 = vmul.f32 %v1771, %v1775
        %v1777 = verf.f32.pop %v1776
        %v1778 = vadd.f32 %v1777, 1.0
        %v1779 = vmul.f32 %v1774, %v1778
        %v1780 = vld [vmem:[%s12] sm:$0xff]
        %v1781 = vld [vmem:[%s12 + $0x8] sm:$0xff]
        %v1782 = vld [vmem:[%s12 + $0x10] sm:$0xff]
        %v1783 = vld [vmem:[%s12 + $0x18] sm:$0xff]
        %v1784 = vld [vmem:[%s12 + $0x20] sm:$0xff]
        %v1785 = vld [vmem:[%s12 + $0x28] sm:$0xff]
        %v1786 = vld [vmem:[%s12 + $0x30] sm:$0xff]
        %v1787 = vld [vmem:[%s12 + $0x38] sm:$0xff]
        %v1788 = vld [vmem:[%s12 + $0x40] sm:$0xff]
        %v1789 = vld [vmem:[%s12 + $0x48] sm:$0xff]
        %v1790 = vld [vmem:[%s12 + $0x50] sm:$0xff]
        %v1791 = vld [vmem:[%s12 + $0x58] sm:$0xff]
        %v1792 = vld [vmem:[%s12 + $0x60] sm:$0xff]
        %v1793 = vld [vmem:[%s12 + $0x68] sm:$0xff]
        %v1794 = vld [vmem:[%s12 + $0x70] sm:$0xff]
        %v1795 = vld [vmem:[%s12 + $0x78] sm:$0xff]
        %v1797 = vlaneseq
        %v1798 = vshrl.u32 %v1797, 7
        %v1799 = vsub.s32 0, %v1798
        %v1800 = vrot.slane %v915, %v1799
        %1802 = vmatprep.subr.mxu0 0.0
        %1803 = vmatpush1.msra.mxu0 %v1780
        %1804 = vmatprep.subr.mxu0 0.0
        %1805 = vmatpush1.msra.mxu0 %v1781
        %1806 = vmatprep.subr.mxu0 0.0
        %1807 = vmatpush1.msra.mxu0 %v1782
        %1808 = vmatprep.subr.mxu0 0.0
        %1809 = vmatpush1.msra.mxu0 %v1783
        %1810 = vmatprep.subr.mxu0 0.0
        %1811 = vmatpush1.msra.mxu0 %v1784
        %1812 = vmatprep.subr.mxu0 0.0
        %1813 = vmatpush1.msra.mxu0 %v1785
        %1814 = vmatprep.subr.mxu0 0.0
        %1815 = vmatpush1.msra.mxu0 %v1786
        %1816 = vmatprep.subr.mxu0 0.0
        %1817 = vmatpush1.msra.mxu0 %v1787
        %1818 = vmatprep.subr.mxu0 0.0
        %1819 = vmatpush1.msra.mxu0 %v1788
        %1820 = vmatprep.subr.mxu0 0.0
        %1821 = vmatpush1.msra.mxu0 %v1789
        %1822 = vmatprep.subr.mxu0 0.0
        %1823 = vmatpush1.msra.mxu0 %v1790
        %1824 = vmatprep.subr.mxu0 0.0
        %1825 = vmatpush1.msra.mxu0 %v1791
        %1826 = vmatprep.subr.mxu0 0.0
        %1827 = vmatpush1.msra.mxu0 %v1792
        %1828 = vmatprep.subr.mxu0 0.0
        %1829 = vmatpush1.msra.mxu0 %v1793
        %1830 = vmatprep.subr.mxu0 0.0
        %1831 = vmatpush1.msra.mxu0 %v1794
        %1832 = vmatprep.subr.mxu0 0.0
        %1833 = vmatpush1.msra.mxu0 %v1795
        %1834 = vmatprep.subr.mxu0 0.0
        %1835 = vmatpush1.msra.mxu0 0.0
        %1836 = vmatprep.subr.mxu0 0.0
        %1837 = vmatpush1.msra.mxu0 0.0
        %1838 = vmatprep.subr.mxu0 0.0
        %1839 = vmatpush1.msra.mxu0 0.0
        %1840 = vmatprep.subr.mxu0 0.0
        %1841 = vmatpush1.msra.mxu0 0.0
        %1842 = vmatprep.subr.mxu0 0.0
        %1843 = vmatpush1.msra.mxu0 0.0
        %1844 = vmatprep.subr.mxu0 0.0
        %1845 = vmatpush1.msra.mxu0 0.0
        %1846 = vmatprep.subr.mxu0 0.0
        %1847 = vmatpush1.msra.mxu0 0.0
        %1848 = vmatprep.subr.mxu0 0.0
        %1849 = vmatpush1.msra.mxu0 0.0
        %1850 = vmatprep.subr.mxu0 0.0
        %1851 = vmatpush1.msra.mxu0 0.0
        %1852 = vmatprep.subr.mxu0 0.0
        %1853 = vmatpush1.msra.mxu0 0.0
        %1854 = vmatprep.subr.mxu0 0.0
        %1855 = vmatpush1.msra.mxu0 0.0
        %1856 = vmatprep.subr.mxu0 0.0
        %1857 = vmatpush1.msra.mxu0 0.0
        %1858 = vmatprep.subr.mxu0 0.0
        %1859 = vmatpush1.msra.mxu0 0.0
        %1860 = vmatprep.subr.mxu0 0.0
        %1861 = vmatpush1.msra.mxu0 0.0
        %1862 = vmatprep.subr.mxu0 0.0
        %1863 = vmatpush1.msra.mxu0 0.0
        %1864 = vmatprep.subr.mxu0 0.0
        %1865 = vmatpush1.msra.mxu0 0.0
        %1866 = vmatprep.mubr.f32.mxu0 0.0
        %1867 = vmatmul.mubr.f32.gmra.mrb[0].mxu0 %v1779
        %v1868 = vpop.f32.mrb[0].mxu0
        %v1869 = vadd.f32 %v1800, %v1868
        %v1870 = vpop.f32.mrb[0].mxu0
        %1871 = vdwg.mxu0
        %v1872 = vadd.f32 %v1869, %v1690
        %v1873 = vsel %vm928, %v1872, 0.0
        %1874 = vadd.xlane.f32.xlu0 %v1873
        %v1875 = vpop.xlane.xlu0 %1874
        %v1876 = vmul.f32 %v1875, %v1666
        %v1877 = vsub.f32 %v1872, %v1876
        %v1878 = vmul.f32 %v1877, %v1877
        %v1879 = vsel %vm928, %v1878, 0.0
        %1880 = vadd.xlane.f32.xlu0 %v1879
        %v1881 = vpop.xlane.xlu0 %1880
        %v1882 = vmul.f32 %v1881, %v1666
        %v1883 = vadd.f32 %v1882, 1e-12
        %v1884 = vrsqrt.pop %v1883
        %v1885 = vmul.f32 %v1877, %v1884
        %v1887 = vlaneseq
        %v1888 = vshrl.u32 %v1887, 7
        %v1889 = vsub.s32 0, %v1888
        %v1890 = vrot.slane %v916, %v1889
        %v1892 = vmul.f32 %v1890, %v1885
        %v1894 = vlaneseq
        %v1895 = vshrl.u32 %v1894, 7
        %v1896 = vsub.s32 0, %v1895
        %v1897 = vrot.slane %v917, %v1896
        %v1899 = vadd.f32 %v1892, %v1897
        %1900 = vst.msk [vmem:[%s547] sm:$0xff] %vm928, %v1899
        %s1901 = sand.u32 %s400, 1
        %s1902 = scalar_lea.sflag [#allocation4], %s1901
        %s1903 = sand.u32 %s400, 1
        %s1904 = smul.addr %s1903, 8
        %s1905 = scalar_lea.vmem [#allocation3], %s1904
        // Predicated region
        $region89: #{tpu_custom_call.1} parent=83 // pred_check
          %p1906 = pneg %p410
        $region90: #{tpu_custom_call.1} parent=83 // pred_check_branch
          %1908 = sbr.rel (%p1906) target = $region92
        $region91: #{tpu_custom_call.1} parent=83 // pred_region
          %s1910 = ssub.s32 128, 128
          %1911 = vsyncadd %s1902, %s1910
          %s1912 = sadd.s32 %s35, %s34
          %s1913 = smul.addr %s1912, 128
          %s1914 = scalar_lea.hbm %s16, %s1913
          %s1916 = sshll.u32 %s1905, 4
          %s1917 = int_to_ptr.vmem [resolvable:$true] %s1916
          %1919 = dma.vmem_to_hbm [thread:$0]  %s1917, 128, %s1914, %s1902
        $region92: #{tpu_custom_call.1} parent=83 // pred_fallthru
          _
      $region84: #{tpu_custom_call.1} parent=5 // pred_fallthru
        _
      %p1920 = scmp.le.s32.totalorder 2, %s25
      // Predicated region
      $region93: #{tpu_custom_call.1} parent=5 // pred_check
        %p1921 = pneg %p1920
      $region94: #{tpu_custom_call.1} parent=5 // pred_check_branch
        %1923 = sbr.rel (%p1921) target = $region96
      $region95: #{tpu_custom_call.1} parent=5 // pred_region
        %s1924 = ssub.s32 %s25, 2
        // Predicated region
        $region97: #{tpu_custom_call.1} parent=95 // pred_check
          %p1925 = pneg %p416
        $region98: #{tpu_custom_call.1} parent=95 // pred_check_branch
          %1927 = sbr.rel (%p1925) target = $region100
        $region99: #{tpu_custom_call.1} parent=95 // pred_region
          %s1928 = sand.u32 %s401, 1
          %s1929 = scalar_lea.sflag [#allocation4], %s1928
          %s1930 = sand.u32 %s401, 1
          %s1931 = smul.addr %s1930, 8
          %s1932 = scalar_lea.vmem [#allocation3], %s1931
          %1933 = dma.done %s1929, 128
        $region100: #{tpu_custom_call.1} parent=95 // pred_fallthru
          _
      $region96: #{tpu_custom_call.1} parent=5 // pred_fallthru
        _
    $region6: #{tpu_custom_call.1} parent=1 // loop_footer
      %s29 = sadd.s32 1, %s25
    $region7: #{tpu_custom_call.1} parent=1 // loop_footer_branch
      %24 = sbr.rel target = $region3
    $region8: #{tpu_custom_call.1} parent=1 // loop_exit
      _
    %1934 = vsyncpa [#allocation4], 1
    %s1935 = scalar_lea.sflag [#allocation4], 1
    %1936 = vsyncpa %s1935, 1

</llo_original>
